<compile_context>
chip_gen: v7x
topology: tpu7x:2x2x1
jax: 0.10.0
libtpu: 0.0.40
codegen_flags: <defaults>
</compile_context>

<pallas_src>
import functools

import jax
import jax.numpy as jnp
from jax.experimental import pallas as pl
from jax.experimental.pallas import tpu as pltpu


def _round_up(x, m):
    return (x + m - 1) // m * m


def _vmem_plan():
    """Per-generation VMEM budgeting (v5e/v6e: 128 MiB, v7x: 64 MiB per TC)."""
    cap = 64 << 20                                    # conservative fallback
    try:
        info = pltpu.get_tpu_info()
        cap = int(getattr(info, "vmem_capacity_bytes", cap))
    except Exception:
        pass
    limit = max(32 << 20, min(cap - (16 << 20), 96 << 20))
    in_budget = min(28 << 20, limit // 2)             # double-buffered input blocks
    return in_budget, limit


def _choose_channel_tile(C, HW, itemsize, in_budget_bytes):
    """Channel tile for streaming; prefer TC | C so no channel padding is needed."""
    lane_bytes = _round_up(HW, 128) * max(int(itemsize), 1)
    tc = max(8, int(in_budget_bytes // (2 * lane_bytes)))   # 2 = double buffering
    if tc >= C:
        return C
    tc = max(8, (tc // 8) * 8)            # (8,128) layout: TC % 8 == 0 (or TC == C)
    d = tc
    while d >= 8:                          # largest multiple-of-8 divisor of C <= tc
        if C % d == 0:
            if d >= max(8, tc // 2):
                return d                   # divisor found: no pad / mask needed
            break
        d -= 8
    return tc                              # fallback: wrapper zero-pads C up to n*TC


def _make_kernel(K, C, TC, H, W, needs_mask, conv_chunk):
    P = K // 2
    HW = H * W
    BASE = P * W + P                       # flat offset of feat inside padded buffer

    def kernel(w_ref, col_ref, x_ref, o_ref, sum_ref, max_ref, pad_ref):
        # w_ref   : SMEM (2*K*K,) f32   conv weights (avg channel pre-scaled by 1/C)
        # col_ref : VMEM (1, HW) int32  output column index (flat index mod W)
        # x_ref   : VMEM (1, TC, HW)    one lane-dense channel tile of one image
        # o_ref   : VMEM (1, 1, HW)     attention map (written on last channel step)
        # sum_ref : VMEM (1, HW) f32    running channel sum
        # max_ref : VMEM (1, HW) f32    running channel max
        # pad_ref : VMEM (2, L)  f32    flat [sum; max] with vertical zero border
        c = pl.program_id(1)
        n_c = pl.num_programs(1)

        @pl.when(c == 0)
        def _init():
            sum_ref[...] = jnp.zeros(sum_ref.shape, jnp.float32)
            max_ref[...] = jnp.full(max_ref.shape, -jnp.inf, jnp.float32)
            # Zero only the P-row flat border of the conv buffer (the interior is
            # fully overwritten every finalize).  Done per image so each core's
            # private scratch is initialized under megacore grid sharding.
            pad_ref[:, pl.ds(0, BASE)] = jnp.zeros((2, BASE), jnp.float32)
            pad_ref[:, pl.ds(BASE + HW, BASE)] = jnp.zeros((2, BASE), jnp.float32)

        x = x_ref[0]                                     # (TC, HW), storage dtype

        def _accum_full():
            xf = x.astype(jnp.float32)
            sum_ref[...] = sum_ref[...] + jnp.sum(xf, axis=0, keepdims=True)
            # max is exact in the storage dtype (bf16-native VPU on v6e/v7x);
            # only the (1, HW) running max lives in f32.
            tile_max = jnp.max(x, axis=0, keepdims=True).astype(jnp.float32)
            max_ref[...] = jnp.maximum(max_ref[...], tile_max)

        if needs_mask:
            # The wrapper zero-padded the channel axis up to a multiple of TC, so
            # every block is fully in-bounds and the sum needs no mask; only the
            # final tile must exclude the zero pad channels from the max, via a
            # cheap (TC, 1) iota mask that broadcasts along lanes.
            @pl.when(c < n_c - 1)
            def _():
                _accum_full()

            @pl.when(c == n_c - 1)
            def _():
                xf = x.astype(jnp.float32)
                sum_ref[...] = sum_ref[...] + jnp.sum(xf, axis=0, keepdims=True)
                ch = c * TC + jax.lax.broadcasted_iota(jnp.int32, (TC, 1), 0)
                xm = jnp.where(ch < C, xf, -jnp.inf)
                max_ref[...] = jnp.maximum(
                    max_ref[...], jnp.max(xm, axis=0, keepdims=True))
        else:
            _accum_full()

        @pl.when(c == n_c - 1)
        def _finalize():
            # Scatter the reduced maps into the interior of the flat, vertically
            # zero-padded buffer (1/C of the mean is folded into the weights).
            pad_ref[0:1, pl.ds(BASE, HW)] = sum_ref[...]
            pad_ref[1:2, pl.ds(BASE, HW)] = max_ref[...]

            # K x K depth-2 conv evaluated directly in the lane-dense flat layout:
            #   out[i] += w[ci,kh,kw] * pad[ci, i + kh*W + kw]      (i = h*W + w)
            # Vertical (H) boundaries come from the zero border of pad_ref;
            # horizontal (W) boundaries from a per-kw mask on the output column,
            # applied once per (ci, kw) to the kh-partial sum.  The flat output
            # is chunked to bound live vregs for large H*W.
            for i0 in range(0, HW, conv_chunk):
                cl = min(conv_chunk, HW - i0)
                col = col_ref[:, pl.ds(i0, cl)]                     # (1, cl) int32
                acc = jnp.zeros((1, cl), jnp.float32)
                for ci in range(2):
                    for kw in range(K):
                        dw = kw - P
                        valid = jnp.logical_and(col + dw >= 0, col + dw < W)
                        part = jnp.zeros((1, cl), jnp.float32)
                        for kh in range(K):
                            wv = w_ref[ci * K * K + kh * K + kw]
                            win = pad_ref[ci:ci + 1, pl.ds(i0 + kh * W + kw, cl)]
                            part = part + wv * win
                        acc = acc + jnp.where(valid, part, 0.0)
                o_ref[0, :, pl.ds(i0, cl)] = jax.nn.sigmoid(acc).astype(o_ref.dtype)

    return kernel


@functools.partial(jax.jit, static_argnames=("K", "channel_tile"))
def spatial_attention(x, w, K: int = 7, channel_tile=None):
    """x: (N, C, H, W); w: (1, 2, K, K) conv weight (no bias). Returns (N, 1, H, W)."""
    N, C, H, W = x.shape
    P = K // 2
    HW = H * W
    L = (H + 2 * P) * W + 2 * P

    # Fold the 1/C of the channel mean into the avg-channel conv weights so the
    # kernel only needs a running channel *sum*.
    w32 = w.astype(jnp.float32)
    w_scaled = w32.at[:, 0, :, :].multiply(1.0 / C)
    w_flat = w_scaled.reshape(-1)                      # (2*K*K,) -> SMEM prefetch

    # Lane-dense layout: stream (1, TC, H*W) blocks so W < 128 wastes no lanes.
    x_flat = x.reshape(N, C, HW)
    col_idx = jnp.broadcast_to(jnp.arange(W, dtype=jnp.int32), (H, W)).reshape(1, HW)

    itemsize = jnp.dtype(x.dtype).itemsize
    in_budget, vmem_limit = _vmem_plan()
    if channel_tile is not None:
        TC = int(channel_tile)
        if TC % 8 != 0 and TC < C:
            raise ValueError("channel_tile must be a multiple of 8 or >= C")
    else:
        TC = _choose_channel_tile(C, HW, itemsize, in_budget)
    n_cblk = pl.cdiv(C, TC)
    C_pad = n_cblk * TC
    needs_mask = C_pad != C
    if needs_mask:
        # Rare fallback (no suitable divisor of C): zero-pad the channel axis so
        # every block is fully in-bounds; the kernel masks only the last tile's
        # max path against the true C.  Costs one extra copy of x in HBM.
        x_flat = jnp.pad(x_flat, ((0, 0), (0, C_pad - C), (0, 0)))

    conv_chunk = min(HW, 4096)                          # bounds live vregs in the conv
    kernel = _make_kernel(K, C, TC, H, W, needs_mask, conv_chunk)

    cost = pl.CostEstimate(
        flops=int(N * (2 * C * HW + 4 * K * K * HW)),
        transcendentals=int(N * HW),
        bytes_accessed=int(N * C_pad * HW * itemsize + N * HW * itemsize
                           + HW * 4 + 2 * K * K * 4),
    )

    # TODO(synk): on v7x (2 TensorCores) with N == 1, add a spatially-parallel
    # grid axis (halo'd row blocks of the reduced maps) so both cores get work;
    # batch-parallel only here.
    out_flat = pl.pallas_call(
        kernel,
        out_shape=jax.ShapeDtypeStruct((N, 1, HW), x.dtype),
        grid_spec=pltpu.PrefetchScalarGridSpec(
            num_scalar_prefetch=1,                      # conv weights -> SMEM
            grid=(N, n_cblk),
            in_specs=[
                pl.BlockSpec((1, HW), lambda b, c, w_s: (0, 0)),         # col index
                pl.BlockSpec((1, TC, HW), lambda b, c, w_s: (b, c, 0)),  # x tile
            ],
            out_specs=pl.BlockSpec((1, 1, HW), lambda b, c, w_s: (b, 0, 0)),
            scratch_shapes=[
                pltpu.VMEM((1, HW), jnp.float32),       # running channel sum
                pltpu.VMEM((1, HW), jnp.float32),       # running channel max
                pltpu.VMEM((2, L), jnp.float32),        # flat padded [sum; max]
            ],
        ),
        compiler_params=pltpu.CompilerParams(
            dimension_semantics=("parallel", "arbitrary"),
            vmem_limit_bytes=int(vmem_limit)),
        cost_estimate=cost,
    )(w_flat, col_idx, x_flat)

    return out_flat.reshape(N, 1, H, W)


def _reference(x, w, K: int = 7):
    """Pure-JAX reference matching the PyTorch module."""
    P = K // 2
    avg = jnp.mean(x, axis=1, keepdims=True)
    mx = jnp.max(x, axis=1, keepdims=True)
    feat = jnp.concatenate([avg, mx], axis=1)                       # (N,2,H,W)
    out = jax.lax.conv_general_dilated(
        feat, w, window_strides=(1, 1), padding=[(P, P), (P, P)],
        dimension_numbers=("NCHW", "OIHW", "NCHW"))
    return jax.nn.sigmoid(out)


if __name__ == "__main__":
    K = 7
    key = jax.random.PRNGKey(0)
    kx, kw_ = jax.random.split(key)
    w = jax.random.normal(kw_, (1, 2, K, K), dtype=jnp.float32) * 0.1

    # 1) Main test: module defaults at small shape (single channel tile).
    N, C, H, W = 2, 4, 16, 16
    x = jax.random.normal(kx, (N, C, H, W), dtype=jnp.float32)
    out = jax.block_until_ready(spatial_attention(x, w, K=K))
    ref = _reference(x, w, K=K)
    assert out.shape == (N, 1, H, W), out.shape
    assert jnp.allclose(out, ref, atol=1e-5, rtol=1e-5), (
        float(jnp.max(jnp.abs(out - ref))))

    # 2) Multi-tile streaming path (TC | C, no masking) with a non-128 width.
    x2 = jax.random.normal(kx, (2, 16, 8, 12), dtype=jnp.float32)
    out2 = jax.block_until_ready(spatial_attention(x2, w, K=K, channel_tile=8))
    ref2 = _reference(x2, w, K=K)
    assert jnp.allclose(out2, ref2, atol=1e-5, rtol=1e-5), (
        float(jnp.max(jnp.abs(out2 - ref2))))

    # 3) Padded / masked tail path (C % TC != 0) with bf16 storage.
    x3 = jax.random.normal(kx, (1, 12, 16, 16), dtype=jnp.bfloat16)
    out3 = jax.block_until_ready(spatial_attention(x3, w, K=K, channel_tile=8))
    ref3 = _reference(x3.astype(jnp.float32), w, K=K)
    assert jnp.allclose(out3.astype(jnp.float32), ref3, atol=1e-2, rtol=1e-2), (
        float(jnp.max(jnp.abs(out3.astype(jnp.float32) - ref3))))

    print("KERNEL_OK")
</pallas_src>

<mosaic_0001>
module attributes {stable_mosaic.version = 11 : i64} {
  func.func @kernel(%arg0: i32, %arg1: i32, %arg2: memref<98xf32, #tpu.memory_space<smem>>, %arg3: memref<1x256xi32, #tpu.memory_space<vmem>>, %arg4: memref<1x4x256xf32, #tpu.memory_space<vmem>>, %arg5: memref<1x1x256xf32, #tpu.memory_space<vmem>>, %arg6: memref<1x256xf32, #tpu.memory_space<vmem>>, %arg7: memref<1x256xf32, #tpu.memory_space<vmem>>, %arg8: memref<2x358xf32, #tpu.memory_space<vmem>>) attributes {dimension_semantics = [#tpu.dimension_semantics<parallel>, #tpu.dimension_semantics<arbitrary>], iteration_bounds = array<i64: 2, 1>, scalar_prefetch = 1 : i64, scratch_operands = 3 : i64, tpu.core_type = #tpu.core_type<tc>, window_params = [{pipeline_mode = #tpu.pipeline_mode<synchronous>, transform_indices = @transform_0, window_bounds = array<i64: 1, 256>}, {transform_indices = @transform_1, window_bounds = array<i64: 1, 4, 256>}, {transform_indices = @transform_2, window_bounds = array<i64: 1, 1, 256>}]} {
    %c0_i32 = arith.constant 0 : i32
    %0 = arith.cmpi eq, %arg1, %c0_i32 : i32
    %1 = arith.extui %0 : i1 to i32
    %c0_i32_0 = arith.constant 0 : i32
    %2 = arith.cmpi ne, %1, %c0_i32_0 : i32
    scf.if %2 {
      %cst_14 = arith.constant 0.000000e+00 : f32
      %18 = vector.broadcast %cst_14 : f32 to vector<1x256xf32>
      %c0_15 = arith.constant 0 : index
      %c0_16 = arith.constant 0 : index
      %19 = vector.load %arg6[%c0_15, %c0_16] : memref<1x256xf32, #tpu.memory_space<vmem>>, vector<1x256xf32>
      tpu.vector_store %arg6[%c0_15, %c0_16], %18 {strides = array<i32>} : memref<1x256xf32, #tpu.memory_space<vmem>>, vector<1x256xf32>,
      %cst_17 = arith.constant 0xFF800000 : f32
      %20 = vector.broadcast %cst_17 : f32 to vector<1x256xf32>
      %c0_18 = arith.constant 0 : index
      %c0_19 = arith.constant 0 : index
      %21 = vector.load %arg7[%c0_18, %c0_19] : memref<1x256xf32, #tpu.memory_space<vmem>>, vector<1x256xf32>
      tpu.vector_store %arg7[%c0_18, %c0_19], %20 {strides = array<i32>} : memref<1x256xf32, #tpu.memory_space<vmem>>, vector<1x256xf32>,
      %cst_20 = arith.constant 0.000000e+00 : f32
      %22 = vector.broadcast %cst_20 : f32 to vector<2x51xf32>
      %c0_21 = arith.constant 0 : index
      %c0_22 = arith.constant 0 : index
      %23 = vector.load %arg8[%c0_21, %c0_22] : memref<2x358xf32, #tpu.memory_space<vmem>>, vector<2x51xf32>
      tpu.vector_store %arg8[%c0_21, %c0_22], %22 {strides = array<i32>} : memref<2x358xf32, #tpu.memory_space<vmem>>, vector<2x51xf32>,
      %cst_23 = arith.constant 0.000000e+00 : f32
      %24 = vector.broadcast %cst_23 : f32 to vector<2x51xf32>
      %c0_24 = arith.constant 0 : index
      %c307 = arith.constant 307 : index
      %25 = vector.load %arg8[%c0_24, %c307] : memref<2x358xf32, #tpu.memory_space<vmem>>, vector<2x51xf32>
      tpu.vector_store %arg8[%c0_24, %c307], %24 {strides = array<i32>} : memref<2x358xf32, #tpu.memory_space<vmem>>, vector<2x51xf32>,
    } else {
    }
    %c0 = arith.constant 0 : index
    %c0_1 = arith.constant 0 : index
    %c0_2 = arith.constant 0 : index
    %3 = vector.load %arg4[%c0, %c0_1, %c0_2] : memref<1x4x256xf32, #tpu.memory_space<vmem>>, vector<1x4x256xf32>
    %4 = vector.shape_cast %3 : vector<1x4x256xf32> to vector<4x256xf32>
    %c0_3 = arith.constant 0 : index
    %c0_4 = arith.constant 0 : index
    %5 = vector.load %arg6[%c0_3, %c0_4] : memref<1x256xf32, #tpu.memory_space<vmem>>, vector<1x256xf32>
    %cst = arith.constant dense<0.000000e+00> : vector<256xf32>
    %6 = vector.multi_reduction <add>, %4, %cst [0] : vector<4x256xf32> to vector<256xf32>
    %7 = vector.shape_cast %6 : vector<256xf32> to vector<1x256xf32>
    %8 = arith.addf %5, %7 : vector<1x256xf32>
    %c0_5 = arith.constant 0 : index
    %c0_6 = arith.constant 0 : index
    %9 = vector.load %arg6[%c0_5, %c0_6] : memref<1x256xf32, #tpu.memory_space<vmem>>, vector<1x256xf32>
    tpu.vector_store %arg6[%c0_5, %c0_6], %8 {strides = array<i32>} : memref<1x256xf32, #tpu.memory_space<vmem>>, vector<1x256xf32>,
    %cst_7 = arith.constant dense<0xFF800000> : vector<256xf32>
    %10 = vector.multi_reduction <maximumf>, %4, %cst_7 [0] : vector<4x256xf32> to vector<256xf32>
    %11 = vector.shape_cast %10 : vector<256xf32> to vector<1x256xf32>
    %c0_8 = arith.constant 0 : index
    %c0_9 = arith.constant 0 : index
    %12 = vector.load %arg7[%c0_8, %c0_9] : memref<1x256xf32, #tpu.memory_space<vmem>>, vector<1x256xf32>
    %13 = arith.maximumf %12, %11 : vector<1x256xf32>
    %c0_10 = arith.constant 0 : index
    %c0_11 = arith.constant 0 : index
    %14 = vector.load %arg7[%c0_10, %c0_11] : memref<1x256xf32, #tpu.memory_space<vmem>>, vector<1x256xf32>
    tpu.vector_store %arg7[%c0_10, %c0_11], %13 {strides = array<i32>} : memref<1x256xf32, #tpu.memory_space<vmem>>, vector<1x256xf32>,
    %c0_i32_12 = arith.constant 0 : i32
    %15 = arith.cmpi eq, %arg1, %c0_i32_12 : i32
    %16 = arith.extui %15 : i1 to i32
    %c0_i32_13 = arith.constant 0 : i32
    %17 = arith.cmpi ne, %16, %c0_i32_13 : i32
    scf.if %17 {
      %c0_14 = arith.constant 0 : index
      %c0_15 = arith.constant 0 : index
      %18 = vector.load %arg6[%c0_14, %c0_15] : memref<1x256xf32, #tpu.memory_space<vmem>>, vector<1x256xf32>
      %c0_16 = arith.constant 0 : index
      %c51 = arith.constant 51 : index
      %19 = vector.load %arg8[%c0_16, %c51] : memref<2x358xf32, #tpu.memory_space<vmem>>, vector<1x256xf32>
      tpu.vector_store %arg8[%c0_16, %c51], %18 {strides = array<i32>} : memref<2x358xf32, #tpu.memory_space<vmem>>, vector<1x256xf32>,
      %c0_17 = arith.constant 0 : index
      %c0_18 = arith.constant 0 : index
      %20 = vector.load %arg7[%c0_17, %c0_18] : memref<1x256xf32, #tpu.memory_space<vmem>>, vector<1x256xf32>
      %c1 = arith.constant 1 : index
      %c51_19 = arith.constant 51 : index
      %21 = vector.load %arg8[%c1, %c51_19] : memref<2x358xf32, #tpu.memory_space<vmem>>, vector<1x256xf32>
      tpu.vector_store %arg8[%c1, %c51_19], %20 {strides = array<i32>} : memref<2x358xf32, #tpu.memory_space<vmem>>, vector<1x256xf32>,
      %c0_20 = arith.constant 0 : index
      %c0_21 = arith.constant 0 : index
      %22 = vector.load %arg3[%c0_20, %c0_21] : memref<1x256xi32, #tpu.memory_space<vmem>>, vector<1x256xi32>
      %cst_22 = arith.constant 0.000000e+00 : f32
      %23 = vector.broadcast %cst_22 : f32 to vector<1x256xf32>
      %c-3_i32 = arith.constant -3 : i32
      %24 = vector.broadcast %c-3_i32 : i32 to vector<1x256xi32>
      %25 = arith.addi %22, %24 : vector<1x256xi32>
      %c0_i32_23 = arith.constant 0 : i32
      %26 = vector.broadcast %c0_i32_23 : i32 to vector<1x256xi32>
      %27 = arith.cmpi sge, %25, %26 : vector<1x256xi32>
      %c-3_i32_24 = arith.constant -3 : i32
      %28 = vector.broadcast %c-3_i32_24 : i32 to vector<1x256xi32>
      %29 = arith.addi %22, %28 : vector<1x256xi32>
      %c16_i32 = arith.constant 16 : i32
      %30 = vector.broadcast %c16_i32 : i32 to vector<1x256xi32>
      %31 = arith.cmpi slt, %29, %30 : vector<1x256xi32>
      %32 = arith.andi %27, %31 : vector<1x256xi1>
      %cst_25 = arith.constant 0.000000e+00 : f32
      %33 = vector.broadcast %cst_25 : f32 to vector<1x256xf32>
      %c0_26 = arith.constant 0 : index
      %34 = memref.load %arg2[%c0_26] : memref<98xf32, #tpu.memory_space<smem>>
      %c0_27 = arith.constant 0 : index
      %c0_28 = arith.constant 0 : index
      %35 = vector.load %arg8[%c0_27, %c0_28] : memref<2x358xf32, #tpu.memory_space<vmem>>, vector<1x256xf32>
      %36 = vector.broadcast %34 : f32 to vector<1x256xf32>
      %37 = arith.mulf %36, %35 : vector<1x256xf32>
      %38 = arith.addf %33, %37 : vector<1x256xf32>
      %c7 = arith.constant 7 : index
      %39 = memref.load %arg2[%c7] : memref<98xf32, #tpu.memory_space<smem>>
      %c0_29 = arith.constant 0 : index
      %c16 = arith.constant 16 : index
      %40 = vector.load %arg8[%c0_29, %c16] : memref<2x358xf32, #tpu.memory_space<vmem>>, vector<1x256xf32>
      %41 = vector.broadcast %39 : f32 to vector<1x256xf32>
      %42 = arith.mulf %41, %40 : vector<1x256xf32>
      %43 = arith.addf %38, %42 : vector<1x256xf32>
      %c14 = arith.constant 14 : index
      %44 = memref.load %arg2[%c14] : memref<98xf32, #tpu.memory_space<smem>>
      %c0_30 = arith.constant 0 : index
      %c32 = arith.constant 32 : index
      %45 = vector.load %arg8[%c0_30, %c32] : memref<2x358xf32, #tpu.memory_space<vmem>>, vector<1x256xf32>
      %46 = vector.broadcast %44 : f32 to vector<1x256xf32>
      %47 = arith.mulf %46, %45 : vector<1x256xf32>
      %48 = arith.addf %43, %47 : vector<1x256xf32>
      %c21 = arith.constant 21 : index
      %49 = memref.load %arg2[%c21] : memref<98xf32, #tpu.memory_space<smem>>
      %c0_31 = arith.constant 0 : index
      %c48 = arith.constant 48 : index
      %50 = vector.load %arg8[%c0_31, %c48] : memref<2x358xf32, #tpu.memory_space<vmem>>, vector<1x256xf32>
      %51 = vector.broadcast %49 : f32 to vector<1x256xf32>
      %52 = arith.mulf %51, %50 : vector<1x256xf32>
      %53 = arith.addf %48, %52 : vector<1x256xf32>
      %c28 = arith.constant 28 : index
      %54 = memref.load %arg2[%c28] : memref<98xf32, #tpu.memory_space<smem>>
      %c0_32 = arith.constant 0 : index
      %c64 = arith.constant 64 : index
      %55 = vector.load %arg8[%c0_32, %c64] : memref<2x358xf32, #tpu.memory_space<vmem>>, vector<1x256xf32>
      %56 = vector.broadcast %54 : f32 to vector<1x256xf32>
      %57 = arith.mulf %56, %55 : vector<1x256xf32>
      %58 = arith.addf %53, %57 : vector<1x256xf32>
      %c35 = arith.constant 35 : index
      %59 = memref.load %arg2[%c35] : memref<98xf32, #tpu.memory_space<smem>>
      %c0_33 = arith.constant 0 : index
      %c80 = arith.constant 80 : index
      %60 = vector.load %arg8[%c0_33, %c80] : memref<2x358xf32, #tpu.memory_space<vmem>>, vector<1x256xf32>
      %61 = vector.broadcast %59 : f32 to vector<1x256xf32>
      %62 = arith.mulf %61, %60 : vector<1x256xf32>
      %63 = arith.addf %58, %62 : vector<1x256xf32>
      %c42 = arith.constant 42 : index
      %64 = memref.load %arg2[%c42] : memref<98xf32, #tpu.memory_space<smem>>
      %c0_34 = arith.constant 0 : index
      %c96 = arith.constant 96 : index
      %65 = vector.load %arg8[%c0_34, %c96] : memref<2x358xf32, #tpu.memory_space<vmem>>, vector<1x256xf32>
      %66 = vector.broadcast %64 : f32 to vector<1x256xf32>
      %67 = arith.mulf %66, %65 : vector<1x256xf32>
      %68 = arith.addf %63, %67 : vector<1x256xf32>
      %cst_35 = arith.constant 0.000000e+00 : f32
      %69 = vector.broadcast %cst_35 : f32 to vector<1x256xf32>
      %70 = arith.select %32, %68, %69 : vector<1x256xi1>, vector<1x256xf32>
      %71 = arith.addf %23, %70 : vector<1x256xf32>
      %c-2_i32 = arith.constant -2 : i32
      %72 = vector.broadcast %c-2_i32 : i32 to vector<1x256xi32>
      %73 = arith.addi %22, %72 : vector<1x256xi32>
      %c0_i32_36 = arith.constant 0 : i32
      %74 = vector.broadcast %c0_i32_36 : i32 to vector<1x256xi32>
      %75 = arith.cmpi sge, %73, %74 : vector<1x256xi32>
      %c-2_i32_37 = arith.constant -2 : i32
      %76 = vector.broadcast %c-2_i32_37 : i32 to vector<1x256xi32>
      %77 = arith.addi %22, %76 : vector<1x256xi32>
      %c16_i32_38 = arith.constant 16 : i32
      %78 = vector.broadcast %c16_i32_38 : i32 to vector<1x256xi32>
      %79 = arith.cmpi slt, %77, %78 : vector<1x256xi32>
      %80 = arith.andi %75, %79 : vector<1x256xi1>
      %cst_39 = arith.constant 0.000000e+00 : f32
      %81 = vector.broadcast %cst_39 : f32 to vector<1x256xf32>
      %c1_40 = arith.constant 1 : index
      %82 = memref.load %arg2[%c1_40] : memref<98xf32, #tpu.memory_space<smem>>
      %c0_41 = arith.constant 0 : index
      %c1_42 = arith.constant 1 : index
      %83 = vector.load %arg8[%c0_41, %c1_42] : memref<2x358xf32, #tpu.memory_space<vmem>>, vector<1x256xf32>
      %84 = vector.broadcast %82 : f32 to vector<1x256xf32>
      %85 = arith.mulf %84, %83 : vector<1x256xf32>
      %86 = arith.addf %81, %85 : vector<1x256xf32>
      %c8 = arith.constant 8 : index
      %87 = memref.load %arg2[%c8] : memref<98xf32, #tpu.memory_space<smem>>
      %c0_43 = arith.constant 0 : index
      %c17 = arith.constant 17 : index
      %88 = vector.load %arg8[%c0_43, %c17] : memref<2x358xf32, #tpu.memory_space<vmem>>, vector<1x256xf32>
      %89 = vector.broadcast %87 : f32 to vector<1x256xf32>
      %90 = arith.mulf %89, %88 : vector<1x256xf32>
      %91 = arith.addf %86, %90 : vector<1x256xf32>
      %c15 = arith.constant 15 : index
      %92 = memref.load %arg2[%c15] : memref<98xf32, #tpu.memory_space<smem>>
      %c0_44 = arith.constant 0 : index
      %c33 = arith.constant 33 : index
      %93 = vector.load %arg8[%c0_44, %c33] : memref<2x358xf32, #tpu.memory_space<vmem>>, vector<1x256xf32>
      %94 = vector.broadcast %92 : f32 to vector<1x256xf32>
      %95 = arith.mulf %94, %93 : vector<1x256xf32>
      %96 = arith.addf %91, %95 : vector<1x256xf32>
      %c22 = arith.constant 22 : index
      %97 = memref.load %arg2[%c22] : memref<98xf32, #tpu.memory_space<smem>>
      %c0_45 = arith.constant 0 : index
      %c49 = arith.constant 49 : index
      %98 = vector.load %arg8[%c0_45, %c49] : memref<2x358xf32, #tpu.memory_space<vmem>>, vector<1x256xf32>
      %99 = vector.broadcast %97 : f32 to vector<1x256xf32>
      %100 = arith.mulf %99, %98 : vector<1x256xf32>
      %101 = arith.addf %96, %100 : vector<1x256xf32>
      %c29 = arith.constant 29 : index
      %102 = memref.load %arg2[%c29] : memref<98xf32, #tpu.memory_space<smem>>
      %c0_46 = arith.constant 0 : index
      %c65 = arith.constant 65 : index
      %103 = vector.load %arg8[%c0_46, %c65] : memref<2x358xf32, #tpu.memory_space<vmem>>, vector<1x256xf32>
      %104 = vector.broadcast %102 : f32 to vector<1x256xf32>
      %105 = arith.mulf %104, %103 : vector<1x256xf32>
      %106 = arith.addf %101, %105 : vector<1x256xf32>
      %c36 = arith.constant 36 : index
      %107 = memref.load %arg2[%c36] : memref<98xf32, #tpu.memory_space<smem>>
      %c0_47 = arith.constant 0 : index
      %c81 = arith.constant 81 : index
      %108 = vector.load %arg8[%c0_47, %c81] : memref<2x358xf32, #tpu.memory_space<vmem>>, vector<1x256xf32>
      %109 = vector.broadcast %107 : f32 to vector<1x256xf32>
      %110 = arith.mulf %109, %108 : vector<1x256xf32>
      %111 = arith.addf %106, %110 : vector<1x256xf32>
      %c43 = arith.constant 43 : index
      %112 = memref.load %arg2[%c43] : memref<98xf32, #tpu.memory_space<smem>>
      %c0_48 = arith.constant 0 : index
      %c97 = arith.constant 97 : index
      %113 = vector.load %arg8[%c0_48, %c97] : memref<2x358xf32, #tpu.memory_space<vmem>>, vector<1x256xf32>
      %114 = vector.broadcast %112 : f32 to vector<1x256xf32>
      %115 = arith.mulf %114, %113 : vector<1x256xf32>
      %116 = arith.addf %111, %115 : vector<1x256xf32>
      %cst_49 = arith.constant 0.000000e+00 : f32
      %117 = vector.broadcast %cst_49 : f32 to vector<1x256xf32>
      %118 = arith.select %80, %116, %117 : vector<1x256xi1>, vector<1x256xf32>
      %119 = arith.addf %71, %118 : vector<1x256xf32>
      %c-1_i32 = arith.constant -1 : i32
      %120 = vector.broadcast %c-1_i32 : i32 to vector<1x256xi32>
      %121 = arith.addi %22, %120 : vector<1x256xi32>
      %c0_i32_50 = arith.constant 0 : i32
      %122 = vector.broadcast %c0_i32_50 : i32 to vector<1x256xi32>
      %123 = arith.cmpi sge, %121, %122 : vector<1x256xi32>
      %c-1_i32_51 = arith.constant -1 : i32
      %124 = vector.broadcast %c-1_i32_51 : i32 to vector<1x256xi32>
      %125 = arith.addi %22, %124 : vector<1x256xi32>
      %c16_i32_52 = arith.constant 16 : i32
      %126 = vector.broadcast %c16_i32_52 : i32 to vector<1x256xi32>
      %127 = arith.cmpi slt, %125, %126 : vector<1x256xi32>
      %128 = arith.andi %123, %127 : vector<1x256xi1>
      %cst_53 = arith.constant 0.000000e+00 : f32
      %129 = vector.broadcast %cst_53 : f32 to vector<1x256xf32>
      %c2 = arith.constant 2 : index
      %130 = memref.load %arg2[%c2] : memref<98xf32, #tpu.memory_space<smem>>
      %c0_54 = arith.constant 0 : index
      %c2_55 = arith.constant 2 : index
      %131 = vector.load %arg8[%c0_54, %c2_55] : memref<2x358xf32, #tpu.memory_space<vmem>>, vector<1x256xf32>
      %132 = vector.broadcast %130 : f32 to vector<1x256xf32>
      %133 = arith.mulf %132, %131 : vector<1x256xf32>
      %134 = arith.addf %129, %133 : vector<1x256xf32>
      %c9 = arith.constant 9 : index
      %135 = memref.load %arg2[%c9] : memref<98xf32, #tpu.memory_space<smem>>
      %c0_56 = arith.constant 0 : index
      %c18 = arith.constant 18 : index
      %136 = vector.load %arg8[%c0_56, %c18] : memref<2x358xf32, #tpu.memory_space<vmem>>, vector<1x256xf32>
      %137 = vector.broadcast %135 : f32 to vector<1x256xf32>
      %138 = arith.mulf %137, %136 : vector<1x256xf32>
      %139 = arith.addf %134, %138 : vector<1x256xf32>
      %c16_57 = arith.constant 16 : index
      %140 = memref.load %arg2[%c16_57] : memref<98xf32, #tpu.memory_space<smem>>
      %c0_58 = arith.constant 0 : index
      %c34 = arith.constant 34 : index
      %141 = vector.load %arg8[%c0_58, %c34] : memref<2x358xf32, #tpu.memory_space<vmem>>, vector<1x256xf32>
      %142 = vector.broadcast %140 : f32 to vector<1x256xf32>
      %143 = arith.mulf %142, %141 : vector<1x256xf32>
      %144 = arith.addf %139, %143 : vector<1x256xf32>
      %c23 = arith.constant 23 : index
      %145 = memref.load %arg2[%c23] : memref<98xf32, #tpu.memory_space<smem>>
      %c0_59 = arith.constant 0 : index
      %c50 = arith.constant 50 : index
      %146 = vector.load %arg8[%c0_59, %c50] : memref<2x358xf32, #tpu.memory_space<vmem>>, vector<1x256xf32>
      %147 = vector.broadcast %145 : f32 to vector<1x256xf32>
      %148 = arith.mulf %147, %146 : vector<1x256xf32>
      %149 = arith.addf %144, %148 : vector<1x256xf32>
      %c30 = arith.constant 30 : index
      %150 = memref.load %arg2[%c30] : memref<98xf32, #tpu.memory_space<smem>>
      %c0_60 = arith.constant 0 : index
      %c66 = arith.constant 66 : index
      %151 = vector.load %arg8[%c0_60, %c66] : memref<2x358xf32, #tpu.memory_space<vmem>>, vector<1x256xf32>
      %152 = vector.broadcast %150 : f32 to vector<1x256xf32>
      %153 = arith.mulf %152, %151 : vector<1x256xf32>
      %154 = arith.addf %149, %153 : vector<1x256xf32>
      %c37 = arith.constant 37 : index
      %155 = memref.load %arg2[%c37] : memref<98xf32, #tpu.memory_space<smem>>
      %c0_61 = arith.constant 0 : index
      %c82 = arith.constant 82 : index
      %156 = vector.load %arg8[%c0_61, %c82] : memref<2x358xf32, #tpu.memory_space<vmem>>, vector<1x256xf32>
      %157 = vector.broadcast %155 : f32 to vector<1x256xf32>
      %158 = arith.mulf %157, %156 : vector<1x256xf32>
      %159 = arith.addf %154, %158 : vector<1x256xf32>
      %c44 = arith.constant 44 : index
      %160 = memref.load %arg2[%c44] : memref<98xf32, #tpu.memory_space<smem>>
      %c0_62 = arith.constant 0 : index
      %c98 = arith.constant 98 : index
      %161 = vector.load %arg8[%c0_62, %c98] : memref<2x358xf32, #tpu.memory_space<vmem>>, vector<1x256xf32>
      %162 = vector.broadcast %160 : f32 to vector<1x256xf32>
      %163 = arith.mulf %162, %161 : vector<1x256xf32>
      %164 = arith.addf %159, %163 : vector<1x256xf32>
      %cst_63 = arith.constant 0.000000e+00 : f32
      %165 = vector.broadcast %cst_63 : f32 to vector<1x256xf32>
      %166 = arith.select %128, %164, %165 : vector<1x256xi1>, vector<1x256xf32>
      %167 = arith.addf %119, %166 : vector<1x256xf32>
      %c0_i32_64 = arith.constant 0 : i32
      %168 = vector.broadcast %c0_i32_64 : i32 to vector<1x256xi32>
      %169 = arith.addi %22, %168 : vector<1x256xi32>
      %c0_i32_65 = arith.constant 0 : i32
      %170 = vector.broadcast %c0_i32_65 : i32 to vector<1x256xi32>
      %171 = arith.cmpi sge, %169, %170 : vector<1x256xi32>
      %c0_i32_66 = arith.constant 0 : i32
      %172 = vector.broadcast %c0_i32_66 : i32 to vector<1x256xi32>
      %173 = arith.addi %22, %172 : vector<1x256xi32>
      %c16_i32_67 = arith.constant 16 : i32
      %174 = vector.broadcast %c16_i32_67 : i32 to vector<1x256xi32>
      %175 = arith.cmpi slt, %173, %174 : vector<1x256xi32>
      %176 = arith.andi %171, %175 : vector<1x256xi1>
      %cst_68 = arith.constant 0.000000e+00 : f32
      %177 = vector.broadcast %cst_68 : f32 to vector<1x256xf32>
      %c3 = arith.constant 3 : index
      %178 = memref.load %arg2[%c3] : memref<98xf32, #tpu.memory_space<smem>>
      %c0_69 = arith.constant 0 : index
      %c3_70 = arith.constant 3 : index
      %179 = vector.load %arg8[%c0_69, %c3_70] : memref<2x358xf32, #tpu.memory_space<vmem>>, vector<1x256xf32>
      %180 = vector.broadcast %178 : f32 to vector<1x256xf32>
      %181 = arith.mulf %180, %179 : vector<1x256xf32>
      %182 = arith.addf %177, %181 : vector<1x256xf32>
      %c10 = arith.constant 10 : index
      %183 = memref.load %arg2[%c10] : memref<98xf32, #tpu.memory_space<smem>>
      %c0_71 = arith.constant 0 : index
      %c19 = arith.constant 19 : index
      %184 = vector.load %arg8[%c0_71, %c19] : memref<2x358xf32, #tpu.memory_space<vmem>>, vector<1x256xf32>
      %185 = vector.broadcast %183 : f32 to vector<1x256xf32>
      %186 = arith.mulf %185, %184 : vector<1x256xf32>
      %187 = arith.addf %182, %186 : vector<1x256xf32>
      %c17_72 = arith.constant 17 : index
      %188 = memref.load %arg2[%c17_72] : memref<98xf32, #tpu.memory_space<smem>>
      %c0_73 = arith.constant 0 : index
      %c35_74 = arith.constant 35 : index
      %189 = vector.load %arg8[%c0_73, %c35_74] : memref<2x358xf32, #tpu.memory_space<vmem>>, vector<1x256xf32>
      %190 = vector.broadcast %188 : f32 to vector<1x256xf32>
      %191 = arith.mulf %190, %189 : vector<1x256xf32>
      %192 = arith.addf %187, %191 : vector<1x256xf32>
      %c24 = arith.constant 24 : index
      %193 = memref.load %arg2[%c24] : memref<98xf32, #tpu.memory_space<smem>>
      %c0_75 = arith.constant 0 : index
      %c51_76 = arith.constant 51 : index
      %194 = vector.load %arg8[%c0_75, %c51_76] : memref<2x358xf32, #tpu.memory_space<vmem>>, vector<1x256xf32>
      %195 = vector.broadcast %193 : f32 to vector<1x256xf32>
      %196 = arith.mulf %195, %194 : vector<1x256xf32>
      %197 = arith.addf %192, %196 : vector<1x256xf32>
      %c31 = arith.constant 31 : index
      %198 = memref.load %arg2[%c31] : memref<98xf32, #tpu.memory_space<smem>>
      %c0_77 = arith.constant 0 : index
      %c67 = arith.constant 67 : index
      %199 = vector.load %arg8[%c0_77, %c67] : memref<2x358xf32, #tpu.memory_space<vmem>>, vector<1x256xf32>
      %200 = vector.broadcast %198 : f32 to vector<1x256xf32>
      %201 = arith.mulf %200, %199 : vector<1x256xf32>
      %202 = arith.addf %197, %201 : vector<1x256xf32>
      %c38 = arith.constant 38 : index
      %203 = memref.load %arg2[%c38] : memref<98xf32, #tpu.memory_space<smem>>
      %c0_78 = arith.constant 0 : index
      %c83 = arith.constant 83 : index
      %204 = vector.load %arg8[%c0_78, %c83] : memref<2x358xf32, #tpu.memory_space<vmem>>, vector<1x256xf32>
      %205 = vector.broadcast %203 : f32 to vector<1x256xf32>
      %206 = arith.mulf %205, %204 : vector<1x256xf32>
      %207 = arith.addf %202, %206 : vector<1x256xf32>
      %c45 = arith.constant 45 : index
      %208 = memref.load %arg2[%c45] : memref<98xf32, #tpu.memory_space<smem>>
      %c0_79 = arith.constant 0 : index
      %c99 = arith.constant 99 : index
      %209 = vector.load %arg8[%c0_79, %c99] : memref<2x358xf32, #tpu.memory_space<vmem>>, vector<1x256xf32>
      %210 = vector.broadcast %208 : f32 to vector<1x256xf32>
      %211 = arith.mulf %210, %209 : vector<1x256xf32>
      %212 = arith.addf %207, %211 : vector<1x256xf32>
      %cst_80 = arith.constant 0.000000e+00 : f32
      %213 = vector.broadcast %cst_80 : f32 to vector<1x256xf32>
      %214 = arith.select %176, %212, %213 : vector<1x256xi1>, vector<1x256xf32>
      %215 = arith.addf %167, %214 : vector<1x256xf32>
      %c1_i32 = arith.constant 1 : i32
      %216 = vector.broadcast %c1_i32 : i32 to vector<1x256xi32>
      %217 = arith.addi %22, %216 : vector<1x256xi32>
      %c0_i32_81 = arith.constant 0 : i32
      %218 = vector.broadcast %c0_i32_81 : i32 to vector<1x256xi32>
      %219 = arith.cmpi sge, %217, %218 : vector<1x256xi32>
      %c1_i32_82 = arith.constant 1 : i32
      %220 = vector.broadcast %c1_i32_82 : i32 to vector<1x256xi32>
      %221 = arith.addi %22, %220 : vector<1x256xi32>
      %c16_i32_83 = arith.constant 16 : i32
      %222 = vector.broadcast %c16_i32_83 : i32 to vector<1x256xi32>
      %223 = arith.cmpi slt, %221, %222 : vector<1x256xi32>
      %224 = arith.andi %219, %223 : vector<1x256xi1>
      %cst_84 = arith.constant 0.000000e+00 : f32
      %225 = vector.broadcast %cst_84 : f32 to vector<1x256xf32>
      %c4 = arith.constant 4 : index
      %226 = memref.load %arg2[%c4] : memref<98xf32, #tpu.memory_space<smem>>
      %c0_85 = arith.constant 0 : index
      %c4_86 = arith.constant 4 : index
      %227 = vector.load %arg8[%c0_85, %c4_86] : memref<2x358xf32, #tpu.memory_space<vmem>>, vector<1x256xf32>
      %228 = vector.broadcast %226 : f32 to vector<1x256xf32>
      %229 = arith.mulf %228, %227 : vector<1x256xf32>
      %230 = arith.addf %225, %229 : vector<1x256xf32>
      %c11 = arith.constant 11 : index
      %231 = memref.load %arg2[%c11] : memref<98xf32, #tpu.memory_space<smem>>
      %c0_87 = arith.constant 0 : index
      %c20 = arith.constant 20 : index
      %232 = vector.load %arg8[%c0_87, %c20] : memref<2x358xf32, #tpu.memory_space<vmem>>, vector<1x256xf32>
      %233 = vector.broadcast %231 : f32 to vector<1x256xf32>
      %234 = arith.mulf %233, %232 : vector<1x256xf32>
      %235 = arith.addf %230, %234 : vector<1x256xf32>
      %c18_88 = arith.constant 18 : index
      %236 = memref.load %arg2[%c18_88] : memref<98xf32, #tpu.memory_space<smem>>
      %c0_89 = arith.constant 0 : index
      %c36_90 = arith.constant 36 : index
      %237 = vector.load %arg8[%c0_89, %c36_90] : memref<2x358xf32, #tpu.memory_space<vmem>>, vector<1x256xf32>
      %238 = vector.broadcast %236 : f32 to vector<1x256xf32>
      %239 = arith.mulf %238, %237 : vector<1x256xf32>
      %240 = arith.addf %235, %239 : vector<1x256xf32>
      %c25 = arith.constant 25 : index
      %241 = memref.load %arg2[%c25] : memref<98xf32, #tpu.memory_space<smem>>
      %c0_91 = arith.constant 0 : index
      %c52 = arith.constant 52 : index
      %242 = vector.load %arg8[%c0_91, %c52] : memref<2x358xf32, #tpu.memory_space<vmem>>, vector<1x256xf32>
      %243 = vector.broadcast %241 : f32 to vector<1x256xf32>
      %244 = arith.mulf %243, %242 : vector<1x256xf32>
      %245 = arith.addf %240, %244 : vector<1x256xf32>
      %c32_92 = arith.constant 32 : index
      %246 = memref.load %arg2[%c32_92] : memref<98xf32, #tpu.memory_space<smem>>
      %c0_93 = arith.constant 0 : index
      %c68 = arith.constant 68 : index
      %247 = vector.load %arg8[%c0_93, %c68] : memref<2x358xf32, #tpu.memory_space<vmem>>, vector<1x256xf32>
      %248 = vector.broadcast %246 : f32 to vector<1x256xf32>
      %249 = arith.mulf %248, %247 : vector<1x256xf32>
      %250 = arith.addf %245, %249 : vector<1x256xf32>
      %c39 = arith.constant 39 : index
      %251 = memref.load %arg2[%c39] : memref<98xf32, #tpu.memory_space<smem>>
      %c0_94 = arith.constant 0 : index
      %c84 = arith.constant 84 : index
      %252 = vector.load %arg8[%c0_94, %c84] : memref<2x358xf32, #tpu.memory_space<vmem>>, vector<1x256xf32>
      %253 = vector.broadcast %251 : f32 to vector<1x256xf32>
      %254 = arith.mulf %253, %252 : vector<1x256xf32>
      %255 = arith.addf %250, %254 : vector<1x256xf32>
      %c46 = arith.constant 46 : index
      %256 = memref.load %arg2[%c46] : memref<98xf32, #tpu.memory_space<smem>>
      %c0_95 = arith.constant 0 : index
      %c100 = arith.constant 100 : index
      %257 = vector.load %arg8[%c0_95, %c100] : memref<2x358xf32, #tpu.memory_space<vmem>>, vector<1x256xf32>
      %258 = vector.broadcast %256 : f32 to vector<1x256xf32>
      %259 = arith.mulf %258, %257 : vector<1x256xf32>
      %260 = arith.addf %255, %259 : vector<1x256xf32>
      %cst_96 = arith.constant 0.000000e+00 : f32
      %261 = vector.broadcast %cst_96 : f32 to vector<1x256xf32>
      %262 = arith.select %224, %260, %261 : vector<1x256xi1>, vector<1x256xf32>
      %263 = arith.addf %215, %262 : vector<1x256xf32>
      %c2_i32 = arith.constant 2 : i32
      %264 = vector.broadcast %c2_i32 : i32 to vector<1x256xi32>
      %265 = arith.addi %22, %264 : vector<1x256xi32>
      %c0_i32_97 = arith.constant 0 : i32
      %266 = vector.broadcast %c0_i32_97 : i32 to vector<1x256xi32>
      %267 = arith.cmpi sge, %265, %266 : vector<1x256xi32>
      %c2_i32_98 = arith.constant 2 : i32
      %268 = vector.broadcast %c2_i32_98 : i32 to vector<1x256xi32>
      %269 = arith.addi %22, %268 : vector<1x256xi32>
      %c16_i32_99 = arith.constant 16 : i32
      %270 = vector.broadcast %c16_i32_99 : i32 to vector<1x256xi32>
      %271 = arith.cmpi slt, %269, %270 : vector<1x256xi32>
      %272 = arith.andi %267, %271 : vector<1x256xi1>
      %cst_100 = arith.constant 0.000000e+00 : f32
      %273 = vector.broadcast %cst_100 : f32 to vector<1x256xf32>
      %c5 = arith.constant 5 : index
      %274 = memref.load %arg2[%c5] : memref<98xf32, #tpu.memory_space<smem>>
      %c0_101 = arith.constant 0 : index
      %c5_102 = arith.constant 5 : index
      %275 = vector.load %arg8[%c0_101, %c5_102] : memref<2x358xf32, #tpu.memory_space<vmem>>, vector<1x256xf32>
      %276 = vector.broadcast %274 : f32 to vector<1x256xf32>
      %277 = arith.mulf %276, %275 : vector<1x256xf32>
      %278 = arith.addf %273, %277 : vector<1x256xf32>
      %c12 = arith.constant 12 : index
      %279 = memref.load %arg2[%c12] : memref<98xf32, #tpu.memory_space<smem>>
      %c0_103 = arith.constant 0 : index
      %c21_104 = arith.constant 21 : index
      %280 = vector.load %arg8[%c0_103, %c21_104] : memref<2x358xf32, #tpu.memory_space<vmem>>, vector<1x256xf32>
      %281 = vector.broadcast %279 : f32 to vector<1x256xf32>
      %282 = arith.mulf %281, %280 : vector<1x256xf32>
      %283 = arith.addf %278, %282 : vector<1x256xf32>
      %c19_105 = arith.constant 19 : index
      %284 = memref.load %arg2[%c19_105] : memref<98xf32, #tpu.memory_space<smem>>
      %c0_106 = arith.constant 0 : index
      %c37_107 = arith.constant 37 : index
      %285 = vector.load %arg8[%c0_106, %c37_107] : memref<2x358xf32, #tpu.memory_space<vmem>>, vector<1x256xf32>
      %286 = vector.broadcast %284 : f32 to vector<1x256xf32>
      %287 = arith.mulf %286, %285 : vector<1x256xf32>
      %288 = arith.addf %283, %287 : vector<1x256xf32>
      %c26 = arith.constant 26 : index
      %289 = memref.load %arg2[%c26] : memref<98xf32, #tpu.memory_space<smem>>
      %c0_108 = arith.constant 0 : index
      %c53 = arith.constant 53 : index
      %290 = vector.load %arg8[%c0_108, %c53] : memref<2x358xf32, #tpu.memory_space<vmem>>, vector<1x256xf32>
      %291 = vector.broadcast %289 : f32 to vector<1x256xf32>
      %292 = arith.mulf %291, %290 : vector<1x256xf32>
      %293 = arith.addf %288, %292 : vector<1x256xf32>
      %c33_109 = arith.constant 33 : index
      %294 = memref.load %arg2[%c33_109] : memref<98xf32, #tpu.memory_space<smem>>
      %c0_110 = arith.constant 0 : index
      %c69 = arith.constant 69 : index
      %295 = vector.load %arg8[%c0_110, %c69] : memref<2x358xf32, #tpu.memory_space<vmem>>, vector<1x256xf32>
      %296 = vector.broadcast %294 : f32 to vector<1x256xf32>
      %297 = arith.mulf %296, %295 : vector<1x256xf32>
      %298 = arith.addf %293, %297 : vector<1x256xf32>
      %c40 = arith.constant 40 : index
      %299 = memref.load %arg2[%c40] : memref<98xf32, #tpu.memory_space<smem>>
      %c0_111 = arith.constant 0 : index
      %c85 = arith.constant 85 : index
      %300 = vector.load %arg8[%c0_111, %c85] : memref<2x358xf32, #tpu.memory_space<vmem>>, vector<1x256xf32>
      %301 = vector.broadcast %299 : f32 to vector<1x256xf32>
      %302 = arith.mulf %301, %300 : vector<1x256xf32>
      %303 = arith.addf %298, %302 : vector<1x256xf32>
      %c47 = arith.constant 47 : index
      %304 = memref.load %arg2[%c47] : memref<98xf32, #tpu.memory_space<smem>>
      %c0_112 = arith.constant 0 : index
      %c101 = arith.constant 101 : index
      %305 = vector.load %arg8[%c0_112, %c101] : memref<2x358xf32, #tpu.memory_space<vmem>>, vector<1x256xf32>
      %306 = vector.broadcast %304 : f32 to vector<1x256xf32>
      %307 = arith.mulf %306, %305 : vector<1x256xf32>
      %308 = arith.addf %303, %307 : vector<1x256xf32>
      %cst_113 = arith.constant 0.000000e+00 : f32
      %309 = vector.broadcast %cst_113 : f32 to vector<1x256xf32>
      %310 = arith.select %272, %308, %309 : vector<1x256xi1>, vector<1x256xf32>
      %311 = arith.addf %263, %310 : vector<1x256xf32>
      %c3_i32 = arith.constant 3 : i32
      %312 = vector.broadcast %c3_i32 : i32 to vector<1x256xi32>
      %313 = arith.addi %22, %312 : vector<1x256xi32>
      %c0_i32_114 = arith.constant 0 : i32
      %314 = vector.broadcast %c0_i32_114 : i32 to vector<1x256xi32>
      %315 = arith.cmpi sge, %313, %314 : vector<1x256xi32>
      %c3_i32_115 = arith.constant 3 : i32
      %316 = vector.broadcast %c3_i32_115 : i32 to vector<1x256xi32>
      %317 = arith.addi %22, %316 : vector<1x256xi32>
      %c16_i32_116 = arith.constant 16 : i32
      %318 = vector.broadcast %c16_i32_116 : i32 to vector<1x256xi32>
      %319 = arith.cmpi slt, %317, %318 : vector<1x256xi32>
      %320 = arith.andi %315, %319 : vector<1x256xi1>
      %cst_117 = arith.constant 0.000000e+00 : f32
      %321 = vector.broadcast %cst_117 : f32 to vector<1x256xf32>
      %c6 = arith.constant 6 : index
      %322 = memref.load %arg2[%c6] : memref<98xf32, #tpu.memory_space<smem>>
      %c0_118 = arith.constant 0 : index
      %c6_119 = arith.constant 6 : index
      %323 = vector.load %arg8[%c0_118, %c6_119] : memref<2x358xf32, #tpu.memory_space<vmem>>, vector<1x256xf32>
      %324 = vector.broadcast %322 : f32 to vector<1x256xf32>
      %325 = arith.mulf %324, %323 : vector<1x256xf32>
      %326 = arith.addf %321, %325 : vector<1x256xf32>
      %c13 = arith.constant 13 : index
      %327 = memref.load %arg2[%c13] : memref<98xf32, #tpu.memory_space<smem>>
      %c0_120 = arith.constant 0 : index
      %c22_121 = arith.constant 22 : index
      %328 = vector.load %arg8[%c0_120, %c22_121] : memref<2x358xf32, #tpu.memory_space<vmem>>, vector<1x256xf32>
      %329 = vector.broadcast %327 : f32 to vector<1x256xf32>
      %330 = arith.mulf %329, %328 : vector<1x256xf32>
      %331 = arith.addf %326, %330 : vector<1x256xf32>
      %c20_122 = arith.constant 20 : index
      %332 = memref.load %arg2[%c20_122] : memref<98xf32, #tpu.memory_space<smem>>
      %c0_123 = arith.constant 0 : index
      %c38_124 = arith.constant 38 : index
      %333 = vector.load %arg8[%c0_123, %c38_124] : memref<2x358xf32, #tpu.memory_space<vmem>>, vector<1x256xf32>
      %334 = vector.broadcast %332 : f32 to vector<1x256xf32>
      %335 = arith.mulf %334, %333 : vector<1x256xf32>
      %336 = arith.addf %331, %335 : vector<1x256xf32>
      %c27 = arith.constant 27 : index
      %337 = memref.load %arg2[%c27] : memref<98xf32, #tpu.memory_space<smem>>
      %c0_125 = arith.constant 0 : index
      %c54 = arith.constant 54 : index
      %338 = vector.load %arg8[%c0_125, %c54] : memref<2x358xf32, #tpu.memory_space<vmem>>, vector<1x256xf32>
      %339 = vector.broadcast %337 : f32 to vector<1x256xf32>
      %340 = arith.mulf %339, %338 : vector<1x256xf32>
      %341 = arith.addf %336, %340 : vector<1x256xf32>
      %c34_126 = arith.constant 34 : index
      %342 = memref.load %arg2[%c34_126] : memref<98xf32, #tpu.memory_space<smem>>
      %c0_127 = arith.constant 0 : index
      %c70 = arith.constant 70 : index
      %343 = vector.load %arg8[%c0_127, %c70] : memref<2x358xf32, #tpu.memory_space<vmem>>, vector<1x256xf32>
      %344 = vector.broadcast %342 : f32 to vector<1x256xf32>
      %345 = arith.mulf %344, %343 : vector<1x256xf32>
      %346 = arith.addf %341, %345 : vector<1x256xf32>
      %c41 = arith.constant 41 : index
      %347 = memref.load %arg2[%c41] : memref<98xf32, #tpu.memory_space<smem>>
      %c0_128 = arith.constant 0 : index
      %c86 = arith.constant 86 : index
      %348 = vector.load %arg8[%c0_128, %c86] : memref<2x358xf32, #tpu.memory_space<vmem>>, vector<1x256xf32>
      %349 = vector.broadcast %347 : f32 to vector<1x256xf32>
      %350 = arith.mulf %349, %348 : vector<1x256xf32>
      %351 = arith.addf %346, %350 : vector<1x256xf32>
      %c48_129 = arith.constant 48 : index
      %352 = memref.load %arg2[%c48_129] : memref<98xf32, #tpu.memory_space<smem>>
      %c0_130 = arith.constant 0 : index
      %c102 = arith.constant 102 : index
      %353 = vector.load %arg8[%c0_130, %c102] : memref<2x358xf32, #tpu.memory_space<vmem>>, vector<1x256xf32>
      %354 = vector.broadcast %352 : f32 to vector<1x256xf32>
      %355 = arith.mulf %354, %353 : vector<1x256xf32>
      %356 = arith.addf %351, %355 : vector<1x256xf32>
      %cst_131 = arith.constant 0.000000e+00 : f32
      %357 = vector.broadcast %cst_131 : f32 to vector<1x256xf32>
      %358 = arith.select %320, %356, %357 : vector<1x256xi1>, vector<1x256xf32>
      %359 = arith.addf %311, %358 : vector<1x256xf32>
      %c-3_i32_132 = arith.constant -3 : i32
      %360 = vector.broadcast %c-3_i32_132 : i32 to vector<1x256xi32>
      %361 = arith.addi %22, %360 : vector<1x256xi32>
      %c0_i32_133 = arith.constant 0 : i32
      %362 = vector.broadcast %c0_i32_133 : i32 to vector<1x256xi32>
      %363 = arith.cmpi sge, %361, %362 : vector<1x256xi32>
      %c-3_i32_134 = arith.constant -3 : i32
      %364 = vector.broadcast %c-3_i32_134 : i32 to vector<1x256xi32>
      %365 = arith.addi %22, %364 : vector<1x256xi32>
      %c16_i32_135 = arith.constant 16 : i32
      %366 = vector.broadcast %c16_i32_135 : i32 to vector<1x256xi32>
      %367 = arith.cmpi slt, %365, %366 : vector<1x256xi32>
      %368 = arith.andi %363, %367 : vector<1x256xi1>
      %cst_136 = arith.constant 0.000000e+00 : f32
      %369 = vector.broadcast %cst_136 : f32 to vector<1x256xf32>
      %c49_137 = arith.constant 49 : index
      %370 = memref.load %arg2[%c49_137] : memref<98xf32, #tpu.memory_space<smem>>
      %c1_138 = arith.constant 1 : index
      %c0_139 = arith.constant 0 : index
      %371 = vector.load %arg8[%c1_138, %c0_139] : memref<2x358xf32, #tpu.memory_space<vmem>>, vector<1x256xf32>
      %372 = vector.broadcast %370 : f32 to vector<1x256xf32>
      %373 = arith.mulf %372, %371 : vector<1x256xf32>
      %374 = arith.addf %369, %373 : vector<1x256xf32>
      %c56 = arith.constant 56 : index
      %375 = memref.load %arg2[%c56] : memref<98xf32, #tpu.memory_space<smem>>
      %c1_140 = arith.constant 1 : index
      %c16_141 = arith.constant 16 : index
      %376 = vector.load %arg8[%c1_140, %c16_141] : memref<2x358xf32, #tpu.memory_space<vmem>>, vector<1x256xf32>
      %377 = vector.broadcast %375 : f32 to vector<1x256xf32>
      %378 = arith.mulf %377, %376 : vector<1x256xf32>
      %379 = arith.addf %374, %378 : vector<1x256xf32>
      %c63 = arith.constant 63 : index
      %380 = memref.load %arg2[%c63] : memref<98xf32, #tpu.memory_space<smem>>
      %c1_142 = arith.constant 1 : index
      %c32_143 = arith.constant 32 : index
      %381 = vector.load %arg8[%c1_142, %c32_143] : memref<2x358xf32, #tpu.memory_space<vmem>>, vector<1x256xf32>
      %382 = vector.broadcast %380 : f32 to vector<1x256xf32>
      %383 = arith.mulf %382, %381 : vector<1x256xf32>
      %384 = arith.addf %379, %383 : vector<1x256xf32>
      %c70_144 = arith.constant 70 : index
      %385 = memref.load %arg2[%c70_144] : memref<98xf32, #tpu.memory_space<smem>>
      %c1_145 = arith.constant 1 : index
      %c48_146 = arith.constant 48 : index
      %386 = vector.load %arg8[%c1_145, %c48_146] : memref<2x358xf32, #tpu.memory_space<vmem>>, vector<1x256xf32>
      %387 = vector.broadcast %385 : f32 to vector<1x256xf32>
      %388 = arith.mulf %387, %386 : vector<1x256xf32>
      %389 = arith.addf %384, %388 : vector<1x256xf32>
      %c77 = arith.constant 77 : index
      %390 = memref.load %arg2[%c77] : memref<98xf32, #tpu.memory_space<smem>>
      %c1_147 = arith.constant 1 : index
      %c64_148 = arith.constant 64 : index
      %391 = vector.load %arg8[%c1_147, %c64_148] : memref<2x358xf32, #tpu.memory_space<vmem>>, vector<1x256xf32>
      %392 = vector.broadcast %390 : f32 to vector<1x256xf32>
      %393 = arith.mulf %392, %391 : vector<1x256xf32>
      %394 = arith.addf %389, %393 : vector<1x256xf32>
      %c84_149 = arith.constant 84 : index
      %395 = memref.load %arg2[%c84_149] : memref<98xf32, #tpu.memory_space<smem>>
      %c1_150 = arith.constant 1 : index
      %c80_151 = arith.constant 80 : index
      %396 = vector.load %arg8[%c1_150, %c80_151] : memref<2x358xf32, #tpu.memory_space<vmem>>, vector<1x256xf32>
      %397 = vector.broadcast %395 : f32 to vector<1x256xf32>
      %398 = arith.mulf %397, %396 : vector<1x256xf32>
      %399 = arith.addf %394, %398 : vector<1x256xf32>
      %c91 = arith.constant 91 : index
      %400 = memref.load %arg2[%c91] : memref<98xf32, #tpu.memory_space<smem>>
      %c1_152 = arith.constant 1 : index
      %c96_153 = arith.constant 96 : index
      %401 = vector.load %arg8[%c1_152, %c96_153] : memref<2x358xf32, #tpu.memory_space<vmem>>, vector<1x256xf32>
      %402 = vector.broadcast %400 : f32 to vector<1x256xf32>
      %403 = arith.mulf %402, %401 : vector<1x256xf32>
      %404 = arith.addf %399, %403 : vector<1x256xf32>
      %cst_154 = arith.constant 0.000000e+00 : f32
      %405 = vector.broadcast %cst_154 : f32 to vector<1x256xf32>
      %406 = arith.select %368, %404, %405 : vector<1x256xi1>, vector<1x256xf32>
      %407 = arith.addf %359, %406 : vector<1x256xf32>
      %c-2_i32_155 = arith.constant -2 : i32
      %408 = vector.broadcast %c-2_i32_155 : i32 to vector<1x256xi32>
      %409 = arith.addi %22, %408 : vector<1x256xi32>
      %c0_i32_156 = arith.constant 0 : i32
      %410 = vector.broadcast %c0_i32_156 : i32 to vector<1x256xi32>
      %411 = arith.cmpi sge, %409, %410 : vector<1x256xi32>
      %c-2_i32_157 = arith.constant -2 : i32
      %412 = vector.broadcast %c-2_i32_157 : i32 to vector<1x256xi32>
      %413 = arith.addi %22, %412 : vector<1x256xi32>
      %c16_i32_158 = arith.constant 16 : i32
      %414 = vector.broadcast %c16_i32_158 : i32 to vector<1x256xi32>
      %415 = arith.cmpi slt, %413, %414 : vector<1x256xi32>
      %416 = arith.andi %411, %415 : vector<1x256xi1>
      %cst_159 = arith.constant 0.000000e+00 : f32
      %417 = vector.broadcast %cst_159 : f32 to vector<1x256xf32>
      %c50_160 = arith.constant 50 : index
      %418 = memref.load %arg2[%c50_160] : memref<98xf32, #tpu.memory_space<smem>>
      %c1_161 = arith.constant 1 : index
      %c1_162 = arith.constant 1 : index
      %419 = vector.load %arg8[%c1_161, %c1_162] : memref<2x358xf32, #tpu.memory_space<vmem>>, vector<1x256xf32>
      %420 = vector.broadcast %418 : f32 to vector<1x256xf32>
      %421 = arith.mulf %420, %419 : vector<1x256xf32>
      %422 = arith.addf %417, %421 : vector<1x256xf32>
      %c57 = arith.constant 57 : index
      %423 = memref.load %arg2[%c57] : memref<98xf32, #tpu.memory_space<smem>>
      %c1_163 = arith.constant 1 : index
      %c17_164 = arith.constant 17 : index
      %424 = vector.load %arg8[%c1_163, %c17_164] : memref<2x358xf32, #tpu.memory_space<vmem>>, vector<1x256xf32>
      %425 = vector.broadcast %423 : f32 to vector<1x256xf32>
      %426 = arith.mulf %425, %424 : vector<1x256xf32>
      %427 = arith.addf %422, %426 : vector<1x256xf32>
      %c64_165 = arith.constant 64 : index
      %428 = memref.load %arg2[%c64_165] : memref<98xf32, #tpu.memory_space<smem>>
      %c1_166 = arith.constant 1 : index
      %c33_167 = arith.constant 33 : index
      %429 = vector.load %arg8[%c1_166, %c33_167] : memref<2x358xf32, #tpu.memory_space<vmem>>, vector<1x256xf32>
      %430 = vector.broadcast %428 : f32 to vector<1x256xf32>
      %431 = arith.mulf %430, %429 : vector<1x256xf32>
      %432 = arith.addf %427, %431 : vector<1x256xf32>
      %c71 = arith.constant 71 : index
      %433 = memref.load %arg2[%c71] : memref<98xf32, #tpu.memory_space<smem>>
      %c1_168 = arith.constant 1 : index
      %c49_169 = arith.constant 49 : index
      %434 = vector.load %arg8[%c1_168, %c49_169] : memref<2x358xf32, #tpu.memory_space<vmem>>, vector<1x256xf32>
      %435 = vector.broadcast %433 : f32 to vector<1x256xf32>
      %436 = arith.mulf %435, %434 : vector<1x256xf32>
      %437 = arith.addf %432, %436 : vector<1x256xf32>
      %c78 = arith.constant 78 : index
      %438 = memref.load %arg2[%c78] : memref<98xf32, #tpu.memory_space<smem>>
      %c1_170 = arith.constant 1 : index
      %c65_171 = arith.constant 65 : index
      %439 = vector.load %arg8[%c1_170, %c65_171] : memref<2x358xf32, #tpu.memory_space<vmem>>, vector<1x256xf32>
      %440 = vector.broadcast %438 : f32 to vector<1x256xf32>
      %441 = arith.mulf %440, %439 : vector<1x256xf32>
      %442 = arith.addf %437, %441 : vector<1x256xf32>
      %c85_172 = arith.constant 85 : index
      %443 = memref.load %arg2[%c85_172] : memref<98xf32, #tpu.memory_space<smem>>
      %c1_173 = arith.constant 1 : index
      %c81_174 = arith.constant 81 : index
      %444 = vector.load %arg8[%c1_173, %c81_174] : memref<2x358xf32, #tpu.memory_space<vmem>>, vector<1x256xf32>
      %445 = vector.broadcast %443 : f32 to vector<1x256xf32>
      %446 = arith.mulf %445, %444 : vector<1x256xf32>
      %447 = arith.addf %442, %446 : vector<1x256xf32>
      %c92 = arith.constant 92 : index
      %448 = memref.load %arg2[%c92] : memref<98xf32, #tpu.memory_space<smem>>
      %c1_175 = arith.constant 1 : index
      %c97_176 = arith.constant 97 : index
      %449 = vector.load %arg8[%c1_175, %c97_176] : memref<2x358xf32, #tpu.memory_space<vmem>>, vector<1x256xf32>
      %450 = vector.broadcast %448 : f32 to vector<1x256xf32>
      %451 = arith.mulf %450, %449 : vector<1x256xf32>
      %452 = arith.addf %447, %451 : vector<1x256xf32>
      %cst_177 = arith.constant 0.000000e+00 : f32
      %453 = vector.broadcast %cst_177 : f32 to vector<1x256xf32>
      %454 = arith.select %416, %452, %453 : vector<1x256xi1>, vector<1x256xf32>
      %455 = arith.addf %407, %454 : vector<1x256xf32>
      %c-1_i32_178 = arith.constant -1 : i32
      %456 = vector.broadcast %c-1_i32_178 : i32 to vector<1x256xi32>
      %457 = arith.addi %22, %456 : vector<1x256xi32>
      %c0_i32_179 = arith.constant 0 : i32
      %458 = vector.broadcast %c0_i32_179 : i32 to vector<1x256xi32>
      %459 = arith.cmpi sge, %457, %458 : vector<1x256xi32>
      %c-1_i32_180 = arith.constant -1 : i32
      %460 = vector.broadcast %c-1_i32_180 : i32 to vector<1x256xi32>
      %461 = arith.addi %22, %460 : vector<1x256xi32>
      %c16_i32_181 = arith.constant 16 : i32
      %462 = vector.broadcast %c16_i32_181 : i32 to vector<1x256xi32>
      %463 = arith.cmpi slt, %461, %462 : vector<1x256xi32>
      %464 = arith.andi %459, %463 : vector<1x256xi1>
      %cst_182 = arith.constant 0.000000e+00 : f32
      %465 = vector.broadcast %cst_182 : f32 to vector<1x256xf32>
      %c51_183 = arith.constant 51 : index
      %466 = memref.load %arg2[%c51_183] : memref<98xf32, #tpu.memory_space<smem>>
      %c1_184 = arith.constant 1 : index
      %c2_185 = arith.constant 2 : index
      %467 = vector.load %arg8[%c1_184, %c2_185] : memref<2x358xf32, #tpu.memory_space<vmem>>, vector<1x256xf32>
      %468 = vector.broadcast %466 : f32 to vector<1x256xf32>
      %469 = arith.mulf %468, %467 : vector<1x256xf32>
      %470 = arith.addf %465, %469 : vector<1x256xf32>
      %c58 = arith.constant 58 : index
      %471 = memref.load %arg2[%c58] : memref<98xf32, #tpu.memory_space<smem>>
      %c1_186 = arith.constant 1 : index
      %c18_187 = arith.constant 18 : index
      %472 = vector.load %arg8[%c1_186, %c18_187] : memref<2x358xf32, #tpu.memory_space<vmem>>, vector<1x256xf32>
      %473 = vector.broadcast %471 : f32 to vector<1x256xf32>
      %474 = arith.mulf %473, %472 : vector<1x256xf32>
      %475 = arith.addf %470, %474 : vector<1x256xf32>
      %c65_188 = arith.constant 65 : index
      %476 = memref.load %arg2[%c65_188] : memref<98xf32, #tpu.memory_space<smem>>
      %c1_189 = arith.constant 1 : index
      %c34_190 = arith.constant 34 : index
      %477 = vector.load %arg8[%c1_189, %c34_190] : memref<2x358xf32, #tpu.memory_space<vmem>>, vector<1x256xf32>
      %478 = vector.broadcast %476 : f32 to vector<1x256xf32>
      %479 = arith.mulf %478, %477 : vector<1x256xf32>
      %480 = arith.addf %475, %479 : vector<1x256xf32>
      %c72 = arith.constant 72 : index
      %481 = memref.load %arg2[%c72] : memref<98xf32, #tpu.memory_space<smem>>
      %c1_191 = arith.constant 1 : index
      %c50_192 = arith.constant 50 : index
      %482 = vector.load %arg8[%c1_191, %c50_192] : memref<2x358xf32, #tpu.memory_space<vmem>>, vector<1x256xf32>
      %483 = vector.broadcast %481 : f32 to vector<1x256xf32>
      %484 = arith.mulf %483, %482 : vector<1x256xf32>
      %485 = arith.addf %480, %484 : vector<1x256xf32>
      %c79 = arith.constant 79 : index
      %486 = memref.load %arg2[%c79] : memref<98xf32, #tpu.memory_space<smem>>
      %c1_193 = arith.constant 1 : index
      %c66_194 = arith.constant 66 : index
      %487 = vector.load %arg8[%c1_193, %c66_194] : memref<2x358xf32, #tpu.memory_space<vmem>>, vector<1x256xf32>
      %488 = vector.broadcast %486 : f32 to vector<1x256xf32>
      %489 = arith.mulf %488, %487 : vector<1x256xf32>
      %490 = arith.addf %485, %489 : vector<1x256xf32>
      %c86_195 = arith.constant 86 : index
      %491 = memref.load %arg2[%c86_195] : memref<98xf32, #tpu.memory_space<smem>>
      %c1_196 = arith.constant 1 : index
      %c82_197 = arith.constant 82 : index
      %492 = vector.load %arg8[%c1_196, %c82_197] : memref<2x358xf32, #tpu.memory_space<vmem>>, vector<1x256xf32>
      %493 = vector.broadcast %491 : f32 to vector<1x256xf32>
      %494 = arith.mulf %493, %492 : vector<1x256xf32>
      %495 = arith.addf %490, %494 : vector<1x256xf32>
      %c93 = arith.constant 93 : index
      %496 = memref.load %arg2[%c93] : memref<98xf32, #tpu.memory_space<smem>>
      %c1_198 = arith.constant 1 : index
      %c98_199 = arith.constant 98 : index
      %497 = vector.load %arg8[%c1_198, %c98_199] : memref<2x358xf32, #tpu.memory_space<vmem>>, vector<1x256xf32>
      %498 = vector.broadcast %496 : f32 to vector<1x256xf32>
      %499 = arith.mulf %498, %497 : vector<1x256xf32>
      %500 = arith.addf %495, %499 : vector<1x256xf32>
      %cst_200 = arith.constant 0.000000e+00 : f32
      %501 = vector.broadcast %cst_200 : f32 to vector<1x256xf32>
      %502 = arith.select %464, %500, %501 : vector<1x256xi1>, vector<1x256xf32>
      %503 = arith.addf %455, %502 : vector<1x256xf32>
      %c0_i32_201 = arith.constant 0 : i32
      %504 = vector.broadcast %c0_i32_201 : i32 to vector<1x256xi32>
      %505 = arith.addi %22, %504 : vector<1x256xi32>
      %c0_i32_202 = arith.constant 0 : i32
      %506 = vector.broadcast %c0_i32_202 : i32 to vector<1x256xi32>
      %507 = arith.cmpi sge, %505, %506 : vector<1x256xi32>
      %c0_i32_203 = arith.constant 0 : i32
      %508 = vector.broadcast %c0_i32_203 : i32 to vector<1x256xi32>
      %509 = arith.addi %22, %508 : vector<1x256xi32>
      %c16_i32_204 = arith.constant 16 : i32
      %510 = vector.broadcast %c16_i32_204 : i32 to vector<1x256xi32>
      %511 = arith.cmpi slt, %509, %510 : vector<1x256xi32>
      %512 = arith.andi %507, %511 : vector<1x256xi1>
      %cst_205 = arith.constant 0.000000e+00 : f32
      %513 = vector.broadcast %cst_205 : f32 to vector<1x256xf32>
      %c52_206 = arith.constant 52 : index
      %514 = memref.load %arg2[%c52_206] : memref<98xf32, #tpu.memory_space<smem>>
      %c1_207 = arith.constant 1 : index
      %c3_208 = arith.constant 3 : index
      %515 = vector.load %arg8[%c1_207, %c3_208] : memref<2x358xf32, #tpu.memory_space<vmem>>, vector<1x256xf32>
      %516 = vector.broadcast %514 : f32 to vector<1x256xf32>
      %517 = arith.mulf %516, %515 : vector<1x256xf32>
      %518 = arith.addf %513, %517 : vector<1x256xf32>
      %c59 = arith.constant 59 : index
      %519 = memref.load %arg2[%c59] : memref<98xf32, #tpu.memory_space<smem>>
      %c1_209 = arith.constant 1 : index
      %c19_210 = arith.constant 19 : index
      %520 = vector.load %arg8[%c1_209, %c19_210] : memref<2x358xf32, #tpu.memory_space<vmem>>, vector<1x256xf32>
      %521 = vector.broadcast %519 : f32 to vector<1x256xf32>
      %522 = arith.mulf %521, %520 : vector<1x256xf32>
      %523 = arith.addf %518, %522 : vector<1x256xf32>
      %c66_211 = arith.constant 66 : index
      %524 = memref.load %arg2[%c66_211] : memref<98xf32, #tpu.memory_space<smem>>
      %c1_212 = arith.constant 1 : index
      %c35_213 = arith.constant 35 : index
      %525 = vector.load %arg8[%c1_212, %c35_213] : memref<2x358xf32, #tpu.memory_space<vmem>>, vector<1x256xf32>
      %526 = vector.broadcast %524 : f32 to vector<1x256xf32>
      %527 = arith.mulf %526, %525 : vector<1x256xf32>
      %528 = arith.addf %523, %527 : vector<1x256xf32>
      %c73 = arith.constant 73 : index
      %529 = memref.load %arg2[%c73] : memref<98xf32, #tpu.memory_space<smem>>
      %c1_214 = arith.constant 1 : index
      %c51_215 = arith.constant 51 : index
      %530 = vector.load %arg8[%c1_214, %c51_215] : memref<2x358xf32, #tpu.memory_space<vmem>>, vector<1x256xf32>
      %531 = vector.broadcast %529 : f32 to vector<1x256xf32>
      %532 = arith.mulf %531, %530 : vector<1x256xf32>
      %533 = arith.addf %528, %532 : vector<1x256xf32>
      %c80_216 = arith.constant 80 : index
      %534 = memref.load %arg2[%c80_216] : memref<98xf32, #tpu.memory_space<smem>>
      %c1_217 = arith.constant 1 : index
      %c67_218 = arith.constant 67 : index
      %535 = vector.load %arg8[%c1_217, %c67_218] : memref<2x358xf32, #tpu.memory_space<vmem>>, vector<1x256xf32>
      %536 = vector.broadcast %534 : f32 to vector<1x256xf32>
      %537 = arith.mulf %536, %535 : vector<1x256xf32>
      %538 = arith.addf %533, %537 : vector<1x256xf32>
      %c87 = arith.constant 87 : index
      %539 = memref.load %arg2[%c87] : memref<98xf32, #tpu.memory_space<smem>>
      %c1_219 = arith.constant 1 : index
      %c83_220 = arith.constant 83 : index
      %540 = vector.load %arg8[%c1_219, %c83_220] : memref<2x358xf32, #tpu.memory_space<vmem>>, vector<1x256xf32>
      %541 = vector.broadcast %539 : f32 to vector<1x256xf32>
      %542 = arith.mulf %541, %540 : vector<1x256xf32>
      %543 = arith.addf %538, %542 : vector<1x256xf32>
      %c94 = arith.constant 94 : index
      %544 = memref.load %arg2[%c94] : memref<98xf32, #tpu.memory_space<smem>>
      %c1_221 = arith.constant 1 : index
      %c99_222 = arith.constant 99 : index
      %545 = vector.load %arg8[%c1_221, %c99_222] : memref<2x358xf32, #tpu.memory_space<vmem>>, vector<1x256xf32>
      %546 = vector.broadcast %544 : f32 to vector<1x256xf32>
      %547 = arith.mulf %546, %545 : vector<1x256xf32>
      %548 = arith.addf %543, %547 : vector<1x256xf32>
      %cst_223 = arith.constant 0.000000e+00 : f32
      %549 = vector.broadcast %cst_223 : f32 to vector<1x256xf32>
      %550 = arith.select %512, %548, %549 : vector<1x256xi1>, vector<1x256xf32>
      %551 = arith.addf %503, %550 : vector<1x256xf32>
      %c1_i32_224 = arith.constant 1 : i32
      %552 = vector.broadcast %c1_i32_224 : i32 to vector<1x256xi32>
      %553 = arith.addi %22, %552 : vector<1x256xi32>
      %c0_i32_225 = arith.constant 0 : i32
      %554 = vector.broadcast %c0_i32_225 : i32 to vector<1x256xi32>
      %555 = arith.cmpi sge, %553, %554 : vector<1x256xi32>
      %c1_i32_226 = arith.constant 1 : i32
      %556 = vector.broadcast %c1_i32_226 : i32 to vector<1x256xi32>
      %557 = arith.addi %22, %556 : vector<1x256xi32>
      %c16_i32_227 = arith.constant 16 : i32
      %558 = vector.broadcast %c16_i32_227 : i32 to vector<1x256xi32>
      %559 = arith.cmpi slt, %557, %558 : vector<1x256xi32>
      %560 = arith.andi %555, %559 : vector<1x256xi1>
      %cst_228 = arith.constant 0.000000e+00 : f32
      %561 = vector.broadcast %cst_228 : f32 to vector<1x256xf32>
      %c53_229 = arith.constant 53 : index
      %562 = memref.load %arg2[%c53_229] : memref<98xf32, #tpu.memory_space<smem>>
      %c1_230 = arith.constant 1 : index
      %c4_231 = arith.constant 4 : index
      %563 = vector.load %arg8[%c1_230, %c4_231] : memref<2x358xf32, #tpu.memory_space<vmem>>, vector<1x256xf32>
      %564 = vector.broadcast %562 : f32 to vector<1x256xf32>
      %565 = arith.mulf %564, %563 : vector<1x256xf32>
      %566 = arith.addf %561, %565 : vector<1x256xf32>
      %c60 = arith.constant 60 : index
      %567 = memref.load %arg2[%c60] : memref<98xf32, #tpu.memory_space<smem>>
      %c1_232 = arith.constant 1 : index
      %c20_233 = arith.constant 20 : index
      %568 = vector.load %arg8[%c1_232, %c20_233] : memref<2x358xf32, #tpu.memory_space<vmem>>, vector<1x256xf32>
      %569 = vector.broadcast %567 : f32 to vector<1x256xf32>
      %570 = arith.mulf %569, %568 : vector<1x256xf32>
      %571 = arith.addf %566, %570 : vector<1x256xf32>
      %c67_234 = arith.constant 67 : index
      %572 = memref.load %arg2[%c67_234] : memref<98xf32, #tpu.memory_space<smem>>
      %c1_235 = arith.constant 1 : index
      %c36_236 = arith.constant 36 : index
      %573 = vector.load %arg8[%c1_235, %c36_236] : memref<2x358xf32, #tpu.memory_space<vmem>>, vector<1x256xf32>
      %574 = vector.broadcast %572 : f32 to vector<1x256xf32>
      %575 = arith.mulf %574, %573 : vector<1x256xf32>
      %576 = arith.addf %571, %575 : vector<1x256xf32>
      %c74 = arith.constant 74 : index
      %577 = memref.load %arg2[%c74] : memref<98xf32, #tpu.memory_space<smem>>
      %c1_237 = arith.constant 1 : index
      %c52_238 = arith.constant 52 : index
      %578 = vector.load %arg8[%c1_237, %c52_238] : memref<2x358xf32, #tpu.memory_space<vmem>>, vector<1x256xf32>
      %579 = vector.broadcast %577 : f32 to vector<1x256xf32>
      %580 = arith.mulf %579, %578 : vector<1x256xf32>
      %581 = arith.addf %576, %580 : vector<1x256xf32>
      %c81_239 = arith.constant 81 : index
      %582 = memref.load %arg2[%c81_239] : memref<98xf32, #tpu.memory_space<smem>>
      %c1_240 = arith.constant 1 : index
      %c68_241 = arith.constant 68 : index
      %583 = vector.load %arg8[%c1_240, %c68_241] : memref<2x358xf32, #tpu.memory_space<vmem>>, vector<1x256xf32>
      %584 = vector.broadcast %582 : f32 to vector<1x256xf32>
      %585 = arith.mulf %584, %583 : vector<1x256xf32>
      %586 = arith.addf %581, %585 : vector<1x256xf32>
      %c88 = arith.constant 88 : index
      %587 = memref.load %arg2[%c88] : memref<98xf32, #tpu.memory_space<smem>>
      %c1_242 = arith.constant 1 : index
      %c84_243 = arith.constant 84 : index
      %588 = vector.load %arg8[%c1_242, %c84_243] : memref<2x358xf32, #tpu.memory_space<vmem>>, vector<1x256xf32>
      %589 = vector.broadcast %587 : f32 to vector<1x256xf32>
      %590 = arith.mulf %589, %588 : vector<1x256xf32>
      %591 = arith.addf %586, %590 : vector<1x256xf32>
      %c95 = arith.constant 95 : index
      %592 = memref.load %arg2[%c95] : memref<98xf32, #tpu.memory_space<smem>>
      %c1_244 = arith.constant 1 : index
      %c100_245 = arith.constant 100 : index
      %593 = vector.load %arg8[%c1_244, %c100_245] : memref<2x358xf32, #tpu.memory_space<vmem>>, vector<1x256xf32>
      %594 = vector.broadcast %592 : f32 to vector<1x256xf32>
      %595 = arith.mulf %594, %593 : vector<1x256xf32>
      %596 = arith.addf %591, %595 : vector<1x256xf32>
      %cst_246 = arith.constant 0.000000e+00 : f32
      %597 = vector.broadcast %cst_246 : f32 to vector<1x256xf32>
      %598 = arith.select %560, %596, %597 : vector<1x256xi1>, vector<1x256xf32>
      %599 = arith.addf %551, %598 : vector<1x256xf32>
      %c2_i32_247 = arith.constant 2 : i32
      %600 = vector.broadcast %c2_i32_247 : i32 to vector<1x256xi32>
      %601 = arith.addi %22, %600 : vector<1x256xi32>
      %c0_i32_248 = arith.constant 0 : i32
      %602 = vector.broadcast %c0_i32_248 : i32 to vector<1x256xi32>
      %603 = arith.cmpi sge, %601, %602 : vector<1x256xi32>
      %c2_i32_249 = arith.constant 2 : i32
      %604 = vector.broadcast %c2_i32_249 : i32 to vector<1x256xi32>
      %605 = arith.addi %22, %604 : vector<1x256xi32>
      %c16_i32_250 = arith.constant 16 : i32
      %606 = vector.broadcast %c16_i32_250 : i32 to vector<1x256xi32>
      %607 = arith.cmpi slt, %605, %606 : vector<1x256xi32>
      %608 = arith.andi %603, %607 : vector<1x256xi1>
      %cst_251 = arith.constant 0.000000e+00 : f32
      %609 = vector.broadcast %cst_251 : f32 to vector<1x256xf32>
      %c54_252 = arith.constant 54 : index
      %610 = memref.load %arg2[%c54_252] : memref<98xf32, #tpu.memory_space<smem>>
      %c1_253 = arith.constant 1 : index
      %c5_254 = arith.constant 5 : index
      %611 = vector.load %arg8[%c1_253, %c5_254] : memref<2x358xf32, #tpu.memory_space<vmem>>, vector<1x256xf32>
      %612 = vector.broadcast %610 : f32 to vector<1x256xf32>
      %613 = arith.mulf %612, %611 : vector<1x256xf32>
      %614 = arith.addf %609, %613 : vector<1x256xf32>
      %c61 = arith.constant 61 : index
      %615 = memref.load %arg2[%c61] : memref<98xf32, #tpu.memory_space<smem>>
      %c1_255 = arith.constant 1 : index
      %c21_256 = arith.constant 21 : index
      %616 = vector.load %arg8[%c1_255, %c21_256] : memref<2x358xf32, #tpu.memory_space<vmem>>, vector<1x256xf32>
      %617 = vector.broadcast %615 : f32 to vector<1x256xf32>
      %618 = arith.mulf %617, %616 : vector<1x256xf32>
      %619 = arith.addf %614, %618 : vector<1x256xf32>
      %c68_257 = arith.constant 68 : index
      %620 = memref.load %arg2[%c68_257] : memref<98xf32, #tpu.memory_space<smem>>
      %c1_258 = arith.constant 1 : index
      %c37_259 = arith.constant 37 : index
      %621 = vector.load %arg8[%c1_258, %c37_259] : memref<2x358xf32, #tpu.memory_space<vmem>>, vector<1x256xf32>
      %622 = vector.broadcast %620 : f32 to vector<1x256xf32>
      %623 = arith.mulf %622, %621 : vector<1x256xf32>
      %624 = arith.addf %619, %623 : vector<1x256xf32>
      %c75 = arith.constant 75 : index
      %625 = memref.load %arg2[%c75] : memref<98xf32, #tpu.memory_space<smem>>
      %c1_260 = arith.constant 1 : index
      %c53_261 = arith.constant 53 : index
      %626 = vector.load %arg8[%c1_260, %c53_261] : memref<2x358xf32, #tpu.memory_space<vmem>>, vector<1x256xf32>
      %627 = vector.broadcast %625 : f32 to vector<1x256xf32>
      %628 = arith.mulf %627, %626 : vector<1x256xf32>
      %629 = arith.addf %624, %628 : vector<1x256xf32>
      %c82_262 = arith.constant 82 : index
      %630 = memref.load %arg2[%c82_262] : memref<98xf32, #tpu.memory_space<smem>>
      %c1_263 = arith.constant 1 : index
      %c69_264 = arith.constant 69 : index
      %631 = vector.load %arg8[%c1_263, %c69_264] : memref<2x358xf32, #tpu.memory_space<vmem>>, vector<1x256xf32>
      %632 = vector.broadcast %630 : f32 to vector<1x256xf32>
      %633 = arith.mulf %632, %631 : vector<1x256xf32>
      %634 = arith.addf %629, %633 : vector<1x256xf32>
      %c89 = arith.constant 89 : index
      %635 = memref.load %arg2[%c89] : memref<98xf32, #tpu.memory_space<smem>>
      %c1_265 = arith.constant 1 : index
      %c85_266 = arith.constant 85 : index
      %636 = vector.load %arg8[%c1_265, %c85_266] : memref<2x358xf32, #tpu.memory_space<vmem>>, vector<1x256xf32>
      %637 = vector.broadcast %635 : f32 to vector<1x256xf32>
      %638 = arith.mulf %637, %636 : vector<1x256xf32>
      %639 = arith.addf %634, %638 : vector<1x256xf32>
      %c96_267 = arith.constant 96 : index
      %640 = memref.load %arg2[%c96_267] : memref<98xf32, #tpu.memory_space<smem>>
      %c1_268 = arith.constant 1 : index
      %c101_269 = arith.constant 101 : index
      %641 = vector.load %arg8[%c1_268, %c101_269] : memref<2x358xf32, #tpu.memory_space<vmem>>, vector<1x256xf32>
      %642 = vector.broadcast %640 : f32 to vector<1x256xf32>
      %643 = arith.mulf %642, %641 : vector<1x256xf32>
      %644 = arith.addf %639, %643 : vector<1x256xf32>
      %cst_270 = arith.constant 0.000000e+00 : f32
      %645 = vector.broadcast %cst_270 : f32 to vector<1x256xf32>
      %646 = arith.select %608, %644, %645 : vector<1x256xi1>, vector<1x256xf32>
      %647 = arith.addf %599, %646 : vector<1x256xf32>
      %c3_i32_271 = arith.constant 3 : i32
      %648 = vector.broadcast %c3_i32_271 : i32 to vector<1x256xi32>
      %649 = arith.addi %22, %648 : vector<1x256xi32>
      %c0_i32_272 = arith.constant 0 : i32
      %650 = vector.broadcast %c0_i32_272 : i32 to vector<1x256xi32>
      %651 = arith.cmpi sge, %649, %650 : vector<1x256xi32>
      %c3_i32_273 = arith.constant 3 : i32
      %652 = vector.broadcast %c3_i32_273 : i32 to vector<1x256xi32>
      %653 = arith.addi %22, %652 : vector<1x256xi32>
      %c16_i32_274 = arith.constant 16 : i32
      %654 = vector.broadcast %c16_i32_274 : i32 to vector<1x256xi32>
      %655 = arith.cmpi slt, %653, %654 : vector<1x256xi32>
      %656 = arith.andi %651, %655 : vector<1x256xi1>
      %cst_275 = arith.constant 0.000000e+00 : f32
      %657 = vector.broadcast %cst_275 : f32 to vector<1x256xf32>
      %c55 = arith.constant 55 : index
      %658 = memref.load %arg2[%c55] : memref<98xf32, #tpu.memory_space<smem>>
      %c1_276 = arith.constant 1 : index
      %c6_277 = arith.constant 6 : index
      %659 = vector.load %arg8[%c1_276, %c6_277] : memref<2x358xf32, #tpu.memory_space<vmem>>, vector<1x256xf32>
      %660 = vector.broadcast %658 : f32 to vector<1x256xf32>
      %661 = arith.mulf %660, %659 : vector<1x256xf32>
      %662 = arith.addf %657, %661 : vector<1x256xf32>
      %c62 = arith.constant 62 : index
      %663 = memref.load %arg2[%c62] : memref<98xf32, #tpu.memory_space<smem>>
      %c1_278 = arith.constant 1 : index
      %c22_279 = arith.constant 22 : index
      %664 = vector.load %arg8[%c1_278, %c22_279] : memref<2x358xf32, #tpu.memory_space<vmem>>, vector<1x256xf32>
      %665 = vector.broadcast %663 : f32 to vector<1x256xf32>
      %666 = arith.mulf %665, %664 : vector<1x256xf32>
      %667 = arith.addf %662, %666 : vector<1x256xf32>
      %c69_280 = arith.constant 69 : index
      %668 = memref.load %arg2[%c69_280] : memref<98xf32, #tpu.memory_space<smem>>
      %c1_281 = arith.constant 1 : index
      %c38_282 = arith.constant 38 : index
      %669 = vector.load %arg8[%c1_281, %c38_282] : memref<2x358xf32, #tpu.memory_space<vmem>>, vector<1x256xf32>
      %670 = vector.broadcast %668 : f32 to vector<1x256xf32>
      %671 = arith.mulf %670, %669 : vector<1x256xf32>
      %672 = arith.addf %667, %671 : vector<1x256xf32>
      %c76 = arith.constant 76 : index
      %673 = memref.load %arg2[%c76] : memref<98xf32, #tpu.memory_space<smem>>
      %c1_283 = arith.constant 1 : index
      %c54_284 = arith.constant 54 : index
      %674 = vector.load %arg8[%c1_283, %c54_284] : memref<2x358xf32, #tpu.memory_space<vmem>>, vector<1x256xf32>
      %675 = vector.broadcast %673 : f32 to vector<1x256xf32>
      %676 = arith.mulf %675, %674 : vector<1x256xf32>
      %677 = arith.addf %672, %676 : vector<1x256xf32>
      %c83_285 = arith.constant 83 : index
      %678 = memref.load %arg2[%c83_285] : memref<98xf32, #tpu.memory_space<smem>>
      %c1_286 = arith.constant 1 : index
      %c70_287 = arith.constant 70 : index
      %679 = vector.load %arg8[%c1_286, %c70_287] : memref<2x358xf32, #tpu.memory_space<vmem>>, vector<1x256xf32>
      %680 = vector.broadcast %678 : f32 to vector<1x256xf32>
      %681 = arith.mulf %680, %679 : vector<1x256xf32>
      %682 = arith.addf %677, %681 : vector<1x256xf32>
      %c90 = arith.constant 90 : index
      %683 = memref.load %arg2[%c90] : memref<98xf32, #tpu.memory_space<smem>>
      %c1_288 = arith.constant 1 : index
      %c86_289 = arith.constant 86 : index
      %684 = vector.load %arg8[%c1_288, %c86_289] : memref<2x358xf32, #tpu.memory_space<vmem>>, vector<1x256xf32>
      %685 = vector.broadcast %683 : f32 to vector<1x256xf32>
      %686 = arith.mulf %685, %684 : vector<1x256xf32>
      %687 = arith.addf %682, %686 : vector<1x256xf32>
      %c97_290 = arith.constant 97 : index
      %688 = memref.load %arg2[%c97_290] : memref<98xf32, #tpu.memory_space<smem>>
      %c1_291 = arith.constant 1 : index
      %c102_292 = arith.constant 102 : index
      %689 = vector.load %arg8[%c1_291, %c102_292] : memref<2x358xf32, #tpu.memory_space<vmem>>, vector<1x256xf32>
      %690 = vector.broadcast %688 : f32 to vector<1x256xf32>
      %691 = arith.mulf %690, %689 : vector<1x256xf32>
      %692 = arith.addf %687, %691 : vector<1x256xf32>
      %cst_293 = arith.constant 0.000000e+00 : f32
      %693 = vector.broadcast %cst_293 : f32 to vector<1x256xf32>
      %694 = arith.select %656, %692, %693 : vector<1x256xi1>, vector<1x256xf32>
      %695 = arith.addf %647, %694 : vector<1x256xf32>
      %696 = arith.negf %695 : vector<1x256xf32>
      %697 = math.exp %696 : vector<1x256xf32>
      %cst_294 = arith.constant 1.000000e+00 : f32
      %698 = vector.broadcast %cst_294 : f32 to vector<1x256xf32>
      %699 = arith.addf %698, %697 : vector<1x256xf32>
      %700 = arith.divf %698, %699 : vector<1x256xf32>
      %c0_295 = arith.constant 0 : index
      %c0_296 = arith.constant 0 : index
      %c0_297 = arith.constant 0 : index
      %701 = vector.load %arg5[%c0_295, %c0_296, %c0_297] : memref<1x1x256xf32, #tpu.memory_space<vmem>>, vector<1x1x256xf32>
      %702 = vector.shape_cast %701 : vector<1x1x256xf32> to vector<1x256xf32>
      %703 = vector.shape_cast %700 : vector<1x256xf32> to vector<1x1x256xf32>
      tpu.vector_store %arg5[%c0_295, %c0_296, %c0_297], %703 {strides = array<i32>} : memref<1x1x256xf32, #tpu.memory_space<vmem>>, vector<1x1x256xf32>,
    } else {
    }
    return
  }
  func.func @transform_0(%arg0: i32, %arg1: i32, %arg2: memref<98xf32, #tpu.memory_space<smem>>) -> (i32, i32) {
    %c0_i32 = arith.constant 0 : i32
    %c0_i32_0 = arith.constant 0 : i32
    %c0_i32_1 = arith.constant 0 : i32
    return %c0_i32, %c0_i32_0 : i32, i32
  }
  func.func @transform_1(%arg0: i32, %arg1: i32, %arg2: memref<98xf32, #tpu.memory_space<smem>>) -> (i32, i32, i32) {
    %c0_i32 = arith.constant 0 : i32
    %c0_i32_0 = arith.constant 0 : i32
    return %arg0, %arg1, %c0_i32 : i32, i32, i32
  }
  func.func @transform_2(%arg0: i32, %arg1: i32, %arg2: memref<98xf32, #tpu.memory_space<smem>>) -> (i32, i32, i32) {
    %c0_i32 = arith.constant 0 : i32
    %c0_i32_0 = arith.constant 0 : i32
    %c0_i32_1 = arith.constant 0 : i32
    return %arg0, %c0_i32, %c0_i32_0 : i32, i32, i32
  }
}

</mosaic_0001>

<llo_original>
// kernel: spatial_attention.1
$region0: #{spatial_attention.1}
  #allocation0 [shape = 'u32[]', space=smem, size = 0x4, offset = 0x4, fixed_abs, tag = 'smem constant byte address 0x4 - core index']
  #allocation1 [shape = 'u32[144,128]{1,0:T(1,128)}', space=vmem, size = 0x12000, scoped, tag = 'internal scratch']
  #allocation2 [shape = 'f32[1,256]{1,0:T(1,128)}', space=vmem, size = 0x400, scoped, tag = 'scratch operand']
  #allocation3 [shape = 'f32[1,256]{1,0:T(1,128)}', space=vmem, size = 0x400, scoped, tag = 'scratch operand']
  #allocation4 [shape = 'f32[2,358]{1,0:T(2,128)}', space=vmem, size = 0xc00, scoped, tag = 'scratch operand']
  #allocation5 [shape = 's32[1]{0}', space=sflag, size = 0x4, scoped, tag = 'scoped memory for spatial_attention.1']
  #allocation6 [shape = 'u8[512]{0}', space=smem, size = 0x200, scoped, tag = 'prefetched SMEM operand 0']
  %s0 = inlined_call_operand.vmem [shape: f32[98], index: 0, kind: input, shape index: {}]
  %s1 = inlined_call_operand.vmem [shape: s32[1,256], index: 1, kind: input, shape index: {}]
  %s2 = inlined_call_operand.vmem [shape: f32[2,4,256], index: 2, kind: input, shape index: {}]
  %s3 = inlined_call_operand.vmem [shape: f32[2,1,256], index: 3, kind: output, shape index: {}]
  %s4 = sld [smem:[#allocation0]]
  $region49: #{spatial_attention.1} parent=0
    _
  %s6 = ssub.s32 1, %s4
  %s7 = scalar_select 0, %s6, %s4
  %s8 = sshll.u32 %s0, 4
  %s9 = int_to_ptr.vmem [resolvable:$true] %s8
  %11 = dma.vmem_to_smem %s9, 16, [#allocation6], [#allocation5]
  %12 = dma.done [#allocation5], 16
  %13 = sfence
  loop: start=0, step=1, limit=4
  $region2: #{spatial_attention.1} parent=0 // loop_pre_header
    _
  $region3: #{spatial_attention.1} parent=0 // loop_header
    %s15 = sphi 0, %s19
    %p16 = scmp.ge.s32.totalorder %s15, 4
    %s22 = sphi 0, %s34
    %s23 = sphi 0, %s30
    %s24 = sphi 0, %s22
    %s25 = sphi 0, %s23
    %s26 = sphi 0, %s24
    %s27 = sphi 0, %s25
    %s35 = sphi 0, %s35
    %s37 = sphi 0, %s35
    %s38 = sphi 0, %s37
    %s52 = sphi 0, %s38
    %s60 = sphi 0, %s62
    %s63 = sphi 0, %s60
    %s64 = sphi 0, %s63
    %s80 = sphi 0, %s64
    %s86 = sphi 0, %s88
    %s89 = sphi 0, %s86
    %s90 = sphi 0, %s89
    %s106 = sphi 0, %s90
  $region4: #{spatial_attention.1} parent=0 // loop_header_branch
    %18 = sbr.rel (%p16) target = $region8
  $region5: #{spatial_attention.1} parent=0 // loop_body
    %s20 = ssub.s32 %s15, 1
    %s21 = ssub.s32 %s15, 2
    %s28 = sadd.s32 1, %s23
    %p29 = scmp.ge.s32.totalorder %s28, 1
    %s30 = scalar_select %p29, 0, %s28
    %s31 = sadd.s32 1, %s22
    %s32 = scalar_select %p29, %s31, %s22
    %p33 = scmp.ge.s32.totalorder %s32, 2
    %s34 = scalar_select %p33, 0, %s32
    %s36 = sadd.s32 %s35, 1
    %p39 = scmp.eq.s32.totalorder %s15, 1
    %p40 = scmp.ne.s32.totalorder %s35, %s37
    %p41 = scmp.eq.s32.totalorder %s15, 0
    %p42 = por %p40, %p41
    %p43 = scmp.ne.s32.totalorder %s35, %s37
    %p44 = scmp.eq.s32.totalorder %s20, 1
    %p45 = por %p43, %p44
    %p46 = scmp.ne.s32.totalorder %s37, %s38
    %p47 = scmp.eq.s32.totalorder %s20, 0
    %p48 = por %p46, %p47
    %p49 = scmp.ne.s32.totalorder %s37, %s38
    %p50 = scmp.eq.s32.totalorder %s21, 1
    %p51 = por %p49, %p50
    %p53 = scmp.ne.s32.totalorder %s38, %s52
    %p54 = scmp.eq.s32.totalorder %s21, 0
    %p55 = por %p53, %p54
    %s56 = ssub.s32 %s22, %s34
    %s57 = ssub.s32 %s23, %s30
    %s58 = sor.u32 %s56, %s57
    %p59 = scmp.eq.s32.totalorder %s58, 0
    %s61 = sadd.s32 %s60, 1
    %s62 = scalar_select %p59, %s60, %s61
    %p65 = pneg %p59
    %p66 = scmp.eq.s32.totalorder %s15, 1
    %p67 = por %p65, %p66
    %p68 = scmp.ne.s32.totalorder %s60, %s63
    %p69 = scmp.eq.s32.totalorder %s15, 0
    %p70 = por %p68, %p69
    %p71 = scmp.ne.s32.totalorder %s60, %s63
    %p72 = scmp.eq.s32.totalorder %s20, 1
    %p73 = por %p71, %p72
    %p74 = scmp.ne.s32.totalorder %s63, %s64
    %p75 = scmp.eq.s32.totalorder %s20, 0
    %p76 = por %p74, %p75
    %p77 = scmp.ne.s32.totalorder %s63, %s64
    %p78 = scmp.eq.s32.totalorder %s21, 1
    %p79 = por %p77, %p78
    %p81 = scmp.ne.s32.totalorder %s64, %s80
    %p82 = scmp.eq.s32.totalorder %s21, 0
    %p83 = por %p81, %p82
    %s84 = ssub.s32 %s22, %s34
    %p85 = scmp.eq.s32.totalorder %s84, 0
    %s87 = sadd.s32 %s86, 1
    %s88 = scalar_select %p85, %s86, %s87
    %p91 = pneg %p85
    %p92 = scmp.eq.s32.totalorder %s15, 1
    %p93 = por %p91, %p92
    %p94 = scmp.ne.s32.totalorder %s86, %s89
    %p95 = scmp.eq.s32.totalorder %s15, 0
    %p96 = por %p94, %p95
    %p97 = scmp.ne.s32.totalorder %s86, %s89
    %p98 = scmp.eq.s32.totalorder %s20, 1
    %p99 = por %p97, %p98
    %p100 = scmp.ne.s32.totalorder %s89, %s90
    %p101 = scmp.eq.s32.totalorder %s20, 0
    %p102 = por %p100, %p101
    %p103 = scmp.ne.s32.totalorder %s89, %s90
    %p104 = scmp.eq.s32.totalorder %s21, 1
    %p105 = por %p103, %p104
    %p107 = scmp.ne.s32.totalorder %s90, %s106
    %p108 = scmp.eq.s32.totalorder %s21, 0
    %p109 = por %p107, %p108
    %p110 = scmp.le.s32.totalorder 1, %s15
    %p111 = scmp.lt.s32.totalorder %s15, 3
    %p112 = pnand %p110, %p111
    %p113 = pneg %p112
    // Predicated region
    $region9: #{spatial_attention.1} parent=5 // pred_check
      _
    $region10: #{spatial_attention.1} parent=5 // pred_check_branch
      %115 = sbr.rel (%p112) target = $region12
    $region11: #{spatial_attention.1} parent=5 // pred_region
      %s116 = ssub.s32 %s15, 1
      // Predicated region
      $region13: #{spatial_attention.1} parent=11 // pred_check
        %p117 = pneg %p48
      $region14: #{spatial_attention.1} parent=11 // pred_check_branch
        %119 = sbr.rel (%p117) target = $region16
      $region15: #{spatial_attention.1} parent=11 // pred_region
        _
      $region16: #{spatial_attention.1} parent=11 // pred_fallthru
        _
    $region12: #{spatial_attention.1} parent=5 // pred_fallthru
      _
    %p120 = scmp.lt.s32.totalorder %s15, 2
    // Predicated region
    $region17: #{spatial_attention.1} parent=5 // pred_check
      %p121 = pneg %p120
    $region18: #{spatial_attention.1} parent=5 // pred_check_branch
      %123 = sbr.rel (%p121) target = $region20
    $region19: #{spatial_attention.1} parent=5 // pred_region
      // Predicated region
      $region21: #{spatial_attention.1} parent=19 // pred_check
        %p124 = pneg %p70
      $region22: #{spatial_attention.1} parent=19 // pred_check_branch
        %126 = sbr.rel (%p124) target = $region24
      $region23: #{spatial_attention.1} parent=19 // pred_region
        %p127 = scmp.lt.s32.totalorder %s22, 1
        %s128 = scalar_select %p127, %s22, 1
        %p129 = scmp.lt.s32.totalorder %s23, 0
        %s130 = scalar_select %p129, %s23, 0
        %s131 = smul.addr %s130, 2
        %s132 = smul.addr %s128, 2
        %s133 = sadd.s32 %s131, %s132
        %s134 = smul.addr %s133, 4
        %s135 = scalar_lea.vmem %s2, %s134
      $region24: #{spatial_attention.1} parent=19 // pred_fallthru
        _
    $region20: #{spatial_attention.1} parent=5 // pred_fallthru
      _
    %p136 = scmp.le.s32.totalorder 1, %s15
    %p137 = scmp.lt.s32.totalorder %s15, 3
    %p138 = pnand %p136, %p137
    %p139 = pneg %p138
    // Predicated region
    $region25: #{spatial_attention.1} parent=5 // pred_check
      _
    $region26: #{spatial_attention.1} parent=5 // pred_check_branch
      %141 = sbr.rel (%p138) target = $region28
    $region27: #{spatial_attention.1} parent=5 // pred_region
      %s142 = ssub.s32 %s15, 1
      %p143 = pneg %p48
      %p144 = pneg %p45
      %p145 = scmp.lt.s32.totalorder %s24, 1
      %s146 = scalar_select %p145, %s24, 1
      %p147 = scmp.lt.s32.totalorder %s25, 0
      %s148 = scalar_select %p147, %s25, 0
      %s149 = smul.addr %s148, 2
      %s150 = smul.addr %s146, 2
      %s151 = sadd.s32 %s149, %s150
      %s152 = smul.addr %s151, 4
      %s153 = scalar_lea.vmem %s2, %s152
      %p154 = pneg %p76
      %p155 = pneg %p73
      %p156 = pneg %p102
      %p157 = pneg %p99
      %p158 = scmp.lt.s32.totalorder %s24, 1
      %s159 = scalar_select %p158, %s24, 1
      %s160 = smul.addr %s159, 2
      %s161 = scalar_lea.vmem %s3, %s160
      %p162 = scmp.lt.s32.totalorder %s24, 1
      %s163 = scalar_select %p162, %s24, 1
      %p164 = scmp.lt.s32.totalorder %s25, 0
      %s165 = scalar_select %p164, %s25, 0
      %s166 = smul.addr %s165, 2
      %s167 = smul.addr %s163, 2
      %s168 = sadd.s32 %s166, %s167
      %s169 = smul.addr %s168, 4
      %s170 = scalar_lea.vmem %s2, %s169
      %p171 = scmp.lt.s32.totalorder %s24, 1
      %s172 = scalar_select %p171, %s24, 1
      %s173 = smul.addr %s172, 2
      %s174 = scalar_lea.vmem %s3, %s173
      %p175 = scmp.eq.s32.totalorder %s25, 0
      // Predicated region
      $region29: #{spatial_attention.1} parent=27 // pred_check
        %p176 = pneg %p175
      $region30: #{spatial_attention.1} parent=27 // pred_check_branch
        %178 = sbr.rel (%p176) target = $region32
      $region31: #{spatial_attention.1} parent=27 // pred_region
        %v179 = vlaneseq
        %vm180 = vcmp.ge.s32.totalorder %v179, 0
        %vm181 = vcmp.lt.s32.totalorder %v179, 256
        %vm182 = vmand %vm180, %vm181
        %183 = vst.msk [vmem:[#allocation2] sm:$0x3] %vm182, 0.0
        %184 = vst.msk [vmem:[#allocation3] sm:$0x3] %vm182, -inf
        %vm185 = vcmask 410624
        %186 = vst.msk [vmem:[#allocation4] sm:$0x3] %vm185, 0.0
        %vm187 = vcmask 828824
        %188 = vst.msk [vmem:[#allocation4 + $0x4] sm:$0x3] %vm187, 0.0
      $region32: #{spatial_attention.1} parent=27 // pred_fallthru
        _
      %v189 = vld [vmem:[%s170] sm:$0xff]
      %v190 = vld [vmem:[#allocation2] sm:$0x3]
      %v192 = vcombine.high %v189, %v189
      %vm194 = vcmask 1043456
      %v195 = vsel %vm194, %v189, 0.0
      %v196 = vrot.slane %v195, 4
      %v197 = vadd.f32 %v195, %v196
      %v198 = vrot.slane %v197, 2
      %v199 = vadd.f32 %v197, %v198
      %v200 = vrot.slane %v199, 1
      %v201 = vadd.f32 %v199, %v200
      %v202 = vsel %vm194, %v192, 0.0
      %v203 = vrot.slane %v202, 4
      %v204 = vadd.f32 %v202, %v203
      %v205 = vrot.slane %v204, 2
      %v206 = vadd.f32 %v204, %v205
      %v207 = vrot.slane %v206, 1
      %v208 = vadd.f32 %v206, %v207
      %v211 = vcombine.low %v201, %v208
      %v213 = vunpack.c.l.s4 1966171168
      %v214 = vunpack.c.0.s8 %v213
      %v215 = vlaneseq
      %v216 = vshrl.u32 %v215, 7
      %v217 = vsub.s32 %v214, %v216
      %v218 = vrot.slane %v211, %v217
      %v220 = vunpack.c.l.s4 1966171168
      %v221 = vunpack.c.0.s8 %v220
      %v222 = vlaneseq
      %v223 = vshrl.u32 %v222, 7
      %v224 = vsub.s32 %v221, %v223
      %v225 = vrot.slane %v218, %v224
      %v227 = vadd.f32 %v190, %v225
      %v228 = vlaneseq
      %vm229 = vcmp.ge.s32.totalorder %v228, 0
      %vm230 = vcmp.lt.s32.totalorder %v228, 256
      %vm231 = vmand %vm229, %vm230
      %232 = vst.msk [vmem:[#allocation2] sm:$0x3] %vm231, %v227
      %v233 = vsel %vm194, %v189, -inf
      %v234 = vrot.slane %v233, 4
      %v235 = vmax.f32 %v233, %v234
      %v236 = vrot.slane %v235, 2
      %v237 = vmax.f32 %v235, %v236
      %v238 = vrot.slane %v237, 1
      %v239 = vmax.f32 %v237, %v238
      %v240 = vsel %vm194, %v192, -inf
      %v241 = vrot.slane %v240, 4
      %v242 = vmax.f32 %v240, %v241
      %v243 = vrot.slane %v242, 2
      %v244 = vmax.f32 %v242, %v243
      %v245 = vrot.slane %v244, 1
      %v246 = vmax.f32 %v244, %v245
      %v247 = vld [vmem:[#allocation3] sm:$0x3]
      %v250 = vcombine.low %v239, %v246
      %v252 = vunpack.c.l.s4 1966171168
      %v253 = vunpack.c.0.s8 %v252
      %v254 = vlaneseq
      %v255 = vshrl.u32 %v254, 7
      %v256 = vsub.s32 %v253, %v255
      %v257 = vrot.slane %v250, %v256
      %v259 = vunpack.c.l.s4 1966171168
      %v260 = vunpack.c.0.s8 %v259
      %v261 = vlaneseq
      %v262 = vshrl.u32 %v261, 7
      %v263 = vsub.s32 %v260, %v262
      %v264 = vrot.slane %v257, %v263
      %v266 = vmax.f32 %v247, %v264
      %267 = vst.msk [vmem:[#allocation3] sm:$0x3] %vm231, %v266
      // Predicated region
      $region33: #{spatial_attention.1} parent=27 // pred_check
        %p268 = pneg %p175
      $region34: #{spatial_attention.1} parent=27 // pred_check_branch
        %270 = sbr.rel (%p268) target = $region36
      $region35: #{spatial_attention.1} parent=27 // pred_region
        %v271 = vld [vmem:[#allocation2] sm:$0x3]
        %273 = vrot.lane.b32.xlu0 %v271, 51
        %v274 = vpop.permute.xlu0 %273
        %v275 = vrot.slane %v274, 7
        %vm276 = vcmask 416768
        %v277 = vsel %vm276, %v275, %v274
        %vm279 = vcmp.ge.s32.totalorder %v228, 51
        %vm280 = vcmp.lt.s32.totalorder %v228, 307
        %vm281 = vmand %vm279, %vm280
        %282 = vst.msk [vmem:[#allocation4] ss:$2 sm:$0x7] %vm281, %v277
        %v283 = vld [vmem:[#allocation3] sm:$0x3]
        %285 = vrot.lane.b32.xlu0 %v283, 51
        %v286 = vpop.permute.xlu0 %285
        %v287 = vrot.slane %v286, 7
        %v288 = vsel %vm276, %v287, %v286
        %s290 = scalar_lea.vmem [#allocation4], 1
        %291 = vst.msk [vmem:[%s290] ss:$2 sm:$0x7] %vm281, %v288
        %v292 = vld [vmem:[%s1] sm:$0x3]
        %v293 = vadd.s32 %v292, 4294967293
        %vm294 = vcmp.ge.s32.totalorder %v293, 0
        %vm295 = vcmp.lt.s32.totalorder %v293, 16
        %vm296 = vmand %vm294, %vm295
        %s297 = sld [smem:[#allocation6]]
        %v298 = vld [vmem:[#allocation4] ss:$2 sm:$0x3]
        %v299 = vstv %s297
        %v300 = vmul.f32 %v299, %v298
        %v301 = vadd.f32 %v300, 0.0
        %s302 = sld [smem:[#allocation6 + $0x7]]
        %v303 = vld [vmem:[#allocation4] ss:$2 sm:$0x7]
        %v304 = vstv %s302
        %v305 = vmul.f32 %v304, %v303
        %307 = vrot.lane.b32.xlu0 %v305, 112
        %v308 = vpop.permute.xlu0 %307
        %v309 = vrot.slane %v308, 1
        %vm310 = vcmask 916480
        %v311 = vsel %vm310, %v308, %v309
        %v313 = vadd.f32 %v301, %v311
        %s314 = sld [smem:[#allocation6 + $0xe]]
        %v315 = vstv %s314
        %v316 = vmul.f32 %v315, %v303
        %318 = vrot.lane.b32.xlu0 %v316, 96
        %v319 = vpop.permute.xlu0 %318
        %v320 = vrot.slane %v319, 1
        %vm321 = vcmask 785408
        %v322 = vsel %vm321, %v319, %v320
        %v324 = vadd.f32 %v313, %v322
        %s325 = sld [smem:[#allocation6 + $0x15]]
        %v326 = vstv %s325
        %v327 = vmul.f32 %v326, %v303
        %329 = vrot.lane.b32.xlu0 %v327, 80
        %v330 = vpop.permute.xlu0 %329
        %v331 = vrot.slane %v330, 1
        %vm332 = vcmask 654336
        %v333 = vsel %vm332, %v330, %v331
        %v335 = vadd.f32 %v324, %v333
        %s336 = sld [smem:[#allocation6 + $0x1c]]
        %v337 = vstv %s336
        %v338 = vmul.f32 %v337, %v303
        %340 = vrot.lane.b32.xlu0 %v338, 64
        %v341 = vpop.permute.xlu0 %340
        %v342 = vrot.slane %v341, 1
        %vm343 = vcmask 523264
        %v344 = vsel %vm343, %v341, %v342
        %v346 = vadd.f32 %v335, %v344
        %s347 = sld [smem:[#allocation6 + $0x23]]
        %v348 = vstv %s347
        %v349 = vmul.f32 %v348, %v303
        %351 = vrot.lane.b32.xlu0 %v349, 48
        %v352 = vpop.permute.xlu0 %351
        %v353 = vrot.slane %v352, 1
        %vm354 = vcmask 392192
        %v355 = vsel %vm354, %v352, %v353
        %v357 = vadd.f32 %v346, %v355
        %s358 = sld [smem:[#allocation6 + $0x2a]]
        %v359 = vstv %s358
        %v360 = vmul.f32 %v359, %v303
        %362 = vrot.lane.b32.xlu0 %v360, 32
        %v363 = vpop.permute.xlu0 %362
        %v364 = vrot.slane %v363, 1
        %vm365 = vcmask 261120
        %v366 = vsel %vm365, %v363, %v364
        %v368 = vadd.f32 %v357, %v366
        %v369 = vsel %vm296, %v368, 0.0
        %v370 = vadd.f32 %v369, 0.0
        %v371 = vadd.s32 %v292, 4294967294
        %vm372 = vcmp.ge.s32.totalorder %v371, 0
        %vm373 = vcmp.lt.s32.totalorder %v371, 16
        %vm374 = vmand %vm372, %vm373
        %s375 = sld [smem:[#allocation6 + $0x1]]
        %v376 = vstv %s375
        %v377 = vmul.f32 %v376, %v303
        %v378 = vadd.f32 %v377, 0.0
        %s379 = sld [smem:[#allocation6 + $0x8]]
        %v380 = vstv %s379
        %v381 = vmul.f32 %v380, %v303
        %383 = vrot.lane.b32.xlu0 %v381, 112
        %v384 = vpop.permute.xlu0 %383
        %v385 = vrot.slane %v384, 1
        %v386 = vsel %vm310, %v384, %v385
        %v388 = vadd.f32 %v378, %v386
        %s389 = sld [smem:[#allocation6 + $0xf]]
        %v390 = vstv %s389
        %v391 = vmul.f32 %v390, %v303
        %393 = vrot.lane.b32.xlu0 %v391, 96
        %v394 = vpop.permute.xlu0 %393
        %v395 = vrot.slane %v394, 1
        %v396 = vsel %vm321, %v394, %v395
        %v398 = vadd.f32 %v388, %v396
        %s399 = sld [smem:[#allocation6 + $0x16]]
        %v400 = vstv %s399
        %v401 = vmul.f32 %v400, %v303
        %403 = vrot.lane.b32.xlu0 %v401, 80
        %v404 = vpop.permute.xlu0 %403
        %v405 = vrot.slane %v404, 1
        %v406 = vsel %vm332, %v404, %v405
        %v408 = vadd.f32 %v398, %v406
        %s409 = sld [smem:[#allocation6 + $0x1d]]
        %v410 = vstv %s409
        %v411 = vmul.f32 %v410, %v303
        %413 = vrot.lane.b32.xlu0 %v411, 64
        %v414 = vpop.permute.xlu0 %413
        %v415 = vrot.slane %v414, 1
        %v416 = vsel %vm343, %v414, %v415
        %v418 = vadd.f32 %v408, %v416
        %s419 = sld [smem:[#allocation6 + $0x24]]
        %v420 = vstv %s419
        %v421 = vmul.f32 %v420, %v303
        %423 = vrot.lane.b32.xlu0 %v421, 48
        %v424 = vpop.permute.xlu0 %423
        %v425 = vrot.slane %v424, 1
        %v426 = vsel %vm354, %v424, %v425
        %v428 = vadd.f32 %v418, %v426
        %s429 = sld [smem:[#allocation6 + $0x2b]]
        %v430 = vstv %s429
        %v431 = vmul.f32 %v430, %v303
        %433 = vrot.lane.b32.xlu0 %v431, 32
        %v434 = vpop.permute.xlu0 %433
        %v435 = vrot.slane %v434, 1
        %v436 = vsel %vm365, %v434, %v435
        %v438 = vadd.f32 %v428, %v436
        %440 = vrot.lane.b32.xlu0 %v438, 127
        %v441 = vpop.permute.xlu0 %440
        %v442 = vrot.slane %v441, 1
        %vm443 = vcmask 1039360
        %v444 = vsel %vm443, %v441, %v442
        %v446 = vsel %vm374, %v444, 0.0
        %v447 = vadd.f32 %v370, %v446
        %v448 = vadd.s32 %v292, 4294967295
        %vm449 = vcmp.ge.s32.totalorder %v448, 0
        %vm450 = vcmp.lt.s32.totalorder %v448, 16
        %vm451 = vmand %vm449, %vm450
        %s452 = sld [smem:[#allocation6 + $0x2]]
        %v453 = vstv %s452
        %v454 = vmul.f32 %v453, %v303
        %v455 = vadd.f32 %v454, 0.0
        %s456 = sld [smem:[#allocation6 + $0x9]]
        %v457 = vstv %s456
        %v458 = vmul.f32 %v457, %v303
        %460 = vrot.lane.b32.xlu0 %v458, 112
        %v461 = vpop.permute.xlu0 %460
        %v462 = vrot.slane %v461, 1
        %v463 = vsel %vm310, %v461, %v462
        %v465 = vadd.f32 %v455, %v463
        %s466 = sld [smem:[#allocation6 + $0x10]]
        %v467 = vstv %s466
        %v468 = vmul.f32 %v467, %v303
        %470 = vrot.lane.b32.xlu0 %v468, 96
        %v471 = vpop.permute.xlu0 %470
        %v472 = vrot.slane %v471, 1
        %v473 = vsel %vm321, %v471, %v472
        %v475 = vadd.f32 %v465, %v473
        %s476 = sld [smem:[#allocation6 + $0x17]]
        %v477 = vstv %s476
        %v478 = vmul.f32 %v477, %v303
        %480 = vrot.lane.b32.xlu0 %v478, 80
        %v481 = vpop.permute.xlu0 %480
        %v482 = vrot.slane %v481, 1
        %v483 = vsel %vm332, %v481, %v482
        %v485 = vadd.f32 %v475, %v483
        %s486 = sld [smem:[#allocation6 + $0x1e]]
        %v487 = vstv %s486
        %v488 = vmul.f32 %v487, %v303
        %490 = vrot.lane.b32.xlu0 %v488, 64
        %v491 = vpop.permute.xlu0 %490
        %v492 = vrot.slane %v491, 1
        %v493 = vsel %vm343, %v491, %v492
        %v495 = vadd.f32 %v485, %v493
        %s496 = sld [smem:[#allocation6 + $0x25]]
        %v497 = vstv %s496
        %v498 = vmul.f32 %v497, %v303
        %500 = vrot.lane.b32.xlu0 %v498, 48
        %v501 = vpop.permute.xlu0 %500
        %v502 = vrot.slane %v501, 1
        %v503 = vsel %vm354, %v501, %v502
        %v505 = vadd.f32 %v495, %v503
        %s506 = sld [smem:[#allocation6 + $0x2c]]
        %v507 = vstv %s506
        %v508 = vmul.f32 %v507, %v303
        %510 = vrot.lane.b32.xlu0 %v508, 32
        %v511 = vpop.permute.xlu0 %510
        %v512 = vrot.slane %v511, 1
        %v513 = vsel %vm365, %v511, %v512
        %v515 = vadd.f32 %v505, %v513
        %517 = vrot.lane.b32.xlu0 %v515, 126
        %v518 = vpop.permute.xlu0 %517
        %v519 = vrot.slane %v518, 1
        %vm520 = vcmask 1031168
        %v521 = vsel %vm520, %v518, %v519
        %v523 = vsel %vm451, %v521, 0.0
        %v524 = vadd.f32 %v447, %v523
        %vm525 = vcmp.ge.s32.totalorder %v292, 0
        %vm526 = vcmp.lt.s32.totalorder %v292, 16
        %vm527 = vmand %vm525, %vm526
        %s528 = sld [smem:[#allocation6 + $0x3]]
        %v529 = vstv %s528
        %v530 = vmul.f32 %v529, %v303
        %v531 = vadd.f32 %v530, 0.0
        %s532 = sld [smem:[#allocation6 + $0xa]]
        %v533 = vstv %s532
        %v534 = vmul.f32 %v533, %v303
        %536 = vrot.lane.b32.xlu0 %v534, 112
        %v537 = vpop.permute.xlu0 %536
        %v538 = vrot.slane %v537, 1
        %v539 = vsel %vm310, %v537, %v538
        %v541 = vadd.f32 %v531, %v539
        %s542 = sld [smem:[#allocation6 + $0x11]]
        %v543 = vstv %s542
        %v544 = vmul.f32 %v543, %v303
        %546 = vrot.lane.b32.xlu0 %v544, 96
        %v547 = vpop.permute.xlu0 %546
        %v548 = vrot.slane %v547, 1
        %v549 = vsel %vm321, %v547, %v548
        %v551 = vadd.f32 %v541, %v549
        %s552 = sld [smem:[#allocation6 + $0x18]]
        %v553 = vstv %s552
        %v554 = vmul.f32 %v553, %v303
        %556 = vrot.lane.b32.xlu0 %v554, 80
        %v557 = vpop.permute.xlu0 %556
        %v558 = vrot.slane %v557, 1
        %v559 = vsel %vm332, %v557, %v558
        %v561 = vadd.f32 %v551, %v559
        %s562 = sld [smem:[#allocation6 + $0x1f]]
        %v563 = vstv %s562
        %v564 = vmul.f32 %v563, %v303
        %566 = vrot.lane.b32.xlu0 %v564, 64
        %v567 = vpop.permute.xlu0 %566
        %v568 = vrot.slane %v567, 1
        %v569 = vsel %vm343, %v567, %v568
        %v571 = vadd.f32 %v561, %v569
        %s572 = sld [smem:[#allocation6 + $0x26]]
        %v573 = vstv %s572
        %v574 = vmul.f32 %v573, %v303
        %576 = vrot.lane.b32.xlu0 %v574, 48
        %v577 = vpop.permute.xlu0 %576
        %v578 = vrot.slane %v577, 1
        %v579 = vsel %vm354, %v577, %v578
        %v581 = vadd.f32 %v571, %v579
        %s582 = sld [smem:[#allocation6 + $0x2d]]
        %v583 = vstv %s582
        %v584 = vmul.f32 %v583, %v303
        %586 = vrot.lane.b32.xlu0 %v584, 32
        %v587 = vpop.permute.xlu0 %586
        %v588 = vrot.slane %v587, 1
        %v589 = vsel %vm365, %v587, %v588
        %v591 = vadd.f32 %v581, %v589
        %593 = vrot.lane.b32.xlu0 %v591, 125
        %v594 = vpop.permute.xlu0 %593
        %v595 = vrot.slane %v594, 1
        %vm596 = vcmask 1022976
        %v597 = vsel %vm596, %v594, %v595
        %v599 = vsel %vm527, %v597, 0.0
        %v600 = vadd.f32 %v524, %v599
        %v601 = vadd.s32 %v292, 1
        %vm602 = vcmp.ge.s32.totalorder %v601, 0
        %vm603 = vcmp.lt.s32.totalorder %v601, 16
        %vm604 = vmand %vm602, %vm603
        %s605 = sld [smem:[#allocation6 + $0x4]]
        %v606 = vstv %s605
        %v607 = vmul.f32 %v606, %v303
        %v608 = vadd.f32 %v607, 0.0
        %s609 = sld [smem:[#allocation6 + $0xb]]
        %v610 = vstv %s609
        %v611 = vmul.f32 %v610, %v303
        %613 = vrot.lane.b32.xlu0 %v611, 112
        %v614 = vpop.permute.xlu0 %613
        %v615 = vrot.slane %v614, 1
        %v616 = vsel %vm310, %v614, %v615
        %v618 = vadd.f32 %v608, %v616
        %s619 = sld [smem:[#allocation6 + $0x12]]
        %v620 = vstv %s619
        %v621 = vmul.f32 %v620, %v303
        %623 = vrot.lane.b32.xlu0 %v621, 96
        %v624 = vpop.permute.xlu0 %623
        %v625 = vrot.slane %v624, 1
        %v626 = vsel %vm321, %v624, %v625
        %v628 = vadd.f32 %v618, %v626
        %s629 = sld [smem:[#allocation6 + $0x19]]
        %v630 = vstv %s629
        %v631 = vmul.f32 %v630, %v303
        %633 = vrot.lane.b32.xlu0 %v631, 80
        %v634 = vpop.permute.xlu0 %633
        %v635 = vrot.slane %v634, 1
        %v636 = vsel %vm332, %v634, %v635
        %v638 = vadd.f32 %v628, %v636
        %s639 = sld [smem:[#allocation6 + $0x20]]
        %v640 = vstv %s639
        %v641 = vmul.f32 %v640, %v303
        %643 = vrot.lane.b32.xlu0 %v641, 64
        %v644 = vpop.permute.xlu0 %643
        %v645 = vrot.slane %v644, 1
        %v646 = vsel %vm343, %v644, %v645
        %v648 = vadd.f32 %v638, %v646
        %s649 = sld [smem:[#allocation6 + $0x27]]
        %v650 = vstv %s649
        %v651 = vmul.f32 %v650, %v303
        %653 = vrot.lane.b32.xlu0 %v651, 48
        %v654 = vpop.permute.xlu0 %653
        %v655 = vrot.slane %v654, 1
        %v656 = vsel %vm354, %v654, %v655
        %v658 = vadd.f32 %v648, %v656
        %s659 = sld [smem:[#allocation6 + $0x2e]]
        %v660 = vstv %s659
        %v661 = vmul.f32 %v660, %v303
        %663 = vrot.lane.b32.xlu0 %v661, 32
        %v664 = vpop.permute.xlu0 %663
        %v665 = vrot.slane %v664, 1
        %v666 = vsel %vm365, %v664, %v665
        %v668 = vadd.f32 %v658, %v666
        %670 = vrot.lane.b32.xlu0 %v668, 124
        %v671 = vpop.permute.xlu0 %670
        %v672 = vrot.slane %v671, 1
        %vm673 = vcmask 1014784
        %v674 = vsel %vm673, %v671, %v672
        %v676 = vsel %vm604, %v674, 0.0
        %v677 = vadd.f32 %v600, %v676
        %v678 = vadd.s32 %v292, 2
        %vm679 = vcmp.ge.s32.totalorder %v678, 0
        %vm680 = vcmp.lt.s32.totalorder %v678, 16
        %vm681 = vmand %vm679, %vm680
        %s682 = sld [smem:[#allocation6 + $0x5]]
        %v683 = vstv %s682
        %v684 = vmul.f32 %v683, %v303
        %v685 = vadd.f32 %v684, 0.0
        %s686 = sld [smem:[#allocation6 + $0xc]]
        %v687 = vstv %s686
        %v688 = vmul.f32 %v687, %v303
        %690 = vrot.lane.b32.xlu0 %v688, 112
        %v691 = vpop.permute.xlu0 %690
        %v692 = vrot.slane %v691, 1
        %v693 = vsel %vm310, %v691, %v692
        %v695 = vadd.f32 %v685, %v693
        %s696 = sld [smem:[#allocation6 + $0x13]]
        %v697 = vstv %s696
        %v698 = vmul.f32 %v697, %v303
        %700 = vrot.lane.b32.xlu0 %v698, 96
        %v701 = vpop.permute.xlu0 %700
        %v702 = vrot.slane %v701, 1
        %v703 = vsel %vm321, %v701, %v702
        %v705 = vadd.f32 %v695, %v703
        %s706 = sld [smem:[#allocation6 + $0x1a]]
        %v707 = vstv %s706
        %v708 = vmul.f32 %v707, %v303
        %710 = vrot.lane.b32.xlu0 %v708, 80
        %v711 = vpop.permute.xlu0 %710
        %v712 = vrot.slane %v711, 1
        %v713 = vsel %vm332, %v711, %v712
        %v715 = vadd.f32 %v705, %v713
        %s716 = sld [smem:[#allocation6 + $0x21]]
        %v717 = vstv %s716
        %v718 = vmul.f32 %v717, %v303
        %720 = vrot.lane.b32.xlu0 %v718, 64
        %v721 = vpop.permute.xlu0 %720
        %v722 = vrot.slane %v721, 1
        %v723 = vsel %vm343, %v721, %v722
        %v725 = vadd.f32 %v715, %v723
        %s726 = sld [smem:[#allocation6 + $0x28]]
        %v727 = vstv %s726
        %v728 = vmul.f32 %v727, %v303
        %730 = vrot.lane.b32.xlu0 %v728, 48
        %v731 = vpop.permute.xlu0 %730
        %v732 = vrot.slane %v731, 1
        %v733 = vsel %vm354, %v731, %v732
        %v735 = vadd.f32 %v725, %v733
        %s736 = sld [smem:[#allocation6 + $0x2f]]
        %v737 = vstv %s736
        %v738 = vmul.f32 %v737, %v303
        %740 = vrot.lane.b32.xlu0 %v738, 32
        %v741 = vpop.permute.xlu0 %740
        %v742 = vrot.slane %v741, 1
        %v743 = vsel %vm365, %v741, %v742
        %v745 = vadd.f32 %v735, %v743
        %747 = vrot.lane.b32.xlu0 %v745, 123
        %v748 = vpop.permute.xlu0 %747
        %v749 = vrot.slane %v748, 1
        %vm750 = vcmask 1006592
        %v751 = vsel %vm750, %v748, %v749
        %v753 = vsel %vm681, %v751, 0.0
        %v754 = vadd.f32 %v677, %v753
        %v755 = vadd.s32 %v292, 3
        %vm756 = vcmp.ge.s32.totalorder %v755, 0
        %vm757 = vcmp.lt.s32.totalorder %v755, 16
        %vm758 = vmand %vm756, %vm757
        %s759 = sld [smem:[#allocation6 + $0x6]]
        %v760 = vstv %s759
        %v761 = vmul.f32 %v760, %v303
        %v762 = vadd.f32 %v761, 0.0
        %s763 = sld [smem:[#allocation6 + $0xd]]
        %v764 = vstv %s763
        %v765 = vmul.f32 %v764, %v303
        %767 = vrot.lane.b32.xlu0 %v765, 112
        %v768 = vpop.permute.xlu0 %767
        %v769 = vrot.slane %v768, 1
        %v770 = vsel %vm310, %v768, %v769
        %v772 = vadd.f32 %v762, %v770
        %s773 = sld [smem:[#allocation6 + $0x14]]
        %v774 = vstv %s773
        %v775 = vmul.f32 %v774, %v303
        %777 = vrot.lane.b32.xlu0 %v775, 96
        %v778 = vpop.permute.xlu0 %777
        %v779 = vrot.slane %v778, 1
        %v780 = vsel %vm321, %v778, %v779
        %v782 = vadd.f32 %v772, %v780
        %s783 = sld [smem:[#allocation6 + $0x1b]]
        %v784 = vstv %s783
        %v785 = vmul.f32 %v784, %v303
        %787 = vrot.lane.b32.xlu0 %v785, 80
        %v788 = vpop.permute.xlu0 %787
        %v789 = vrot.slane %v788, 1
        %v790 = vsel %vm332, %v788, %v789
        %v792 = vadd.f32 %v782, %v790
        %s793 = sld [smem:[#allocation6 + $0x22]]
        %v794 = vstv %s793
        %v795 = vmul.f32 %v794, %v303
        %797 = vrot.lane.b32.xlu0 %v795, 64
        %v798 = vpop.permute.xlu0 %797
        %v799 = vrot.slane %v798, 1
        %v800 = vsel %vm343, %v798, %v799
        %v802 = vadd.f32 %v792, %v800
        %s803 = sld [smem:[#allocation6 + $0x29]]
        %v804 = vstv %s803
        %v805 = vmul.f32 %v804, %v303
        %807 = vrot.lane.b32.xlu0 %v805, 48
        %v808 = vpop.permute.xlu0 %807
        %v809 = vrot.slane %v808, 1
        %v810 = vsel %vm354, %v808, %v809
        %v812 = vadd.f32 %v802, %v810
        %s813 = sld [smem:[#allocation6 + $0x30]]
        %v814 = vstv %s813
        %v815 = vmul.f32 %v814, %v303
        %817 = vrot.lane.b32.xlu0 %v815, 32
        %v818 = vpop.permute.xlu0 %817
        %v819 = vrot.slane %v818, 1
        %v820 = vsel %vm365, %v818, %v819
        %v822 = vadd.f32 %v812, %v820
        %824 = vrot.lane.b32.xlu0 %v822, 122
        %v825 = vpop.permute.xlu0 %824
        %v826 = vrot.slane %v825, 1
        %vm827 = vcmask 998400
        %v828 = vsel %vm827, %v825, %v826
        %v830 = vsel %vm758, %v828, 0.0
        %v831 = vadd.f32 %v754, %v830
        %s832 = sld [smem:[#allocation6 + $0x31]]
        %v833 = vld [vmem:[%s290] ss:$2 sm:$0x3]
        %v834 = vstv %s832
        %v835 = vmul.f32 %v834, %v833
        %v836 = vadd.f32 %v835, 0.0
        %s837 = sld [smem:[#allocation6 + $0x38]]
        %v838 = vld [vmem:[%s290] ss:$2 sm:$0x7]
        %v839 = vstv %s837
        %v840 = vmul.f32 %v839, %v838
        %842 = vrot.lane.b32.xlu0 %v840, 112
        %v843 = vpop.permute.xlu0 %842
        %v844 = vrot.slane %v843, 1
        %v845 = vsel %vm310, %v843, %v844
        %v847 = vadd.f32 %v836, %v845
        %s848 = sld [smem:[#allocation6 + $0x3f]]
        %v849 = vstv %s848
        %v850 = vmul.f32 %v849, %v838
        %852 = vrot.lane.b32.xlu0 %v850, 96
        %v853 = vpop.permute.xlu0 %852
        %v854 = vrot.slane %v853, 1
        %v855 = vsel %vm321, %v853, %v854
        %v857 = vadd.f32 %v847, %v855
        %s858 = sld [smem:[#allocation6 + $0x46]]
        %v859 = vstv %s858
        %v860 = vmul.f32 %v859, %v838
        %862 = vrot.lane.b32.xlu0 %v860, 80
        %v863 = vpop.permute.xlu0 %862
        %v864 = vrot.slane %v863, 1
        %v865 = vsel %vm332, %v863, %v864
        %v867 = vadd.f32 %v857, %v865
        %s868 = sld [smem:[#allocation6 + $0x4d]]
        %v869 = vstv %s868
        %v870 = vmul.f32 %v869, %v838
        %872 = vrot.lane.b32.xlu0 %v870, 64
        %v873 = vpop.permute.xlu0 %872
        %v874 = vrot.slane %v873, 1
        %v875 = vsel %vm343, %v873, %v874
        %v877 = vadd.f32 %v867, %v875
        %s878 = sld [smem:[#allocation6 + $0x54]]
        %v879 = vstv %s878
        %v880 = vmul.f32 %v879, %v838
        %882 = vrot.lane.b32.xlu0 %v880, 48
        %v883 = vpop.permute.xlu0 %882
        %v884 = vrot.slane %v883, 1
        %v885 = vsel %vm354, %v883, %v884
        %v887 = vadd.f32 %v877, %v885
        %s888 = sld [smem:[#allocation6 + $0x5b]]
        %v889 = vstv %s888
        %v890 = vmul.f32 %v889, %v838
        %892 = vrot.lane.b32.xlu0 %v890, 32
        %v893 = vpop.permute.xlu0 %892
        %v894 = vrot.slane %v893, 1
        %v895 = vsel %vm365, %v893, %v894
        %v897 = vadd.f32 %v887, %v895
        %v898 = vsel %vm296, %v897, 0.0
        %v899 = vadd.f32 %v831, %v898
        %s900 = sld [smem:[#allocation6 + $0x32]]
        %v901 = vstv %s900
        %v902 = vmul.f32 %v901, %v838
        %v903 = vadd.f32 %v902, 0.0
        %s904 = sld [smem:[#allocation6 + $0x39]]
        %v905 = vstv %s904
        %v906 = vmul.f32 %v905, %v838
        %908 = vrot.lane.b32.xlu0 %v906, 112
        %v909 = vpop.permute.xlu0 %908
        %v910 = vrot.slane %v909, 1
        %v911 = vsel %vm310, %v909, %v910
        %v913 = vadd.f32 %v903, %v911
        %s914 = sld [smem:[#allocation6 + $0x40]]
        %v915 = vstv %s914
        %v916 = vmul.f32 %v915, %v838
        %918 = vrot.lane.b32.xlu0 %v916, 96
        %v919 = vpop.permute.xlu0 %918
        %v920 = vrot.slane %v919, 1
        %v921 = vsel %vm321, %v919, %v920
        %v923 = vadd.f32 %v913, %v921
        %s924 = sld [smem:[#allocation6 + $0x47]]
        %v925 = vstv %s924
        %v926 = vmul.f32 %v925, %v838
        %928 = vrot.lane.b32.xlu0 %v926, 80
        %v929 = vpop.permute.xlu0 %928
        %v930 = vrot.slane %v929, 1
        %v931 = vsel %vm332, %v929, %v930
        %v933 = vadd.f32 %v923, %v931
        %s934 = sld [smem:[#allocation6 + $0x4e]]
        %v935 = vstv %s934
        %v936 = vmul.f32 %v935, %v838
        %938 = vrot.lane.b32.xlu0 %v936, 64
        %v939 = vpop.permute.xlu0 %938
        %v940 = vrot.slane %v939, 1
        %v941 = vsel %vm343, %v939, %v940
        %v943 = vadd.f32 %v933, %v941
        %s944 = sld [smem:[#allocation6 + $0x55]]
        %v945 = vstv %s944
        %v946 = vmul.f32 %v945, %v838
        %948 = vrot.lane.b32.xlu0 %v946, 48
        %v949 = vpop.permute.xlu0 %948
        %v950 = vrot.slane %v949, 1
        %v951 = vsel %vm354, %v949, %v950
        %v953 = vadd.f32 %v943, %v951
        %s954 = sld [smem:[#allocation6 + $0x5c]]
        %v955 = vstv %s954
        %v956 = vmul.f32 %v955, %v838
        %958 = vrot.lane.b32.xlu0 %v956, 32
        %v959 = vpop.permute.xlu0 %958
        %v960 = vrot.slane %v959, 1
        %v961 = vsel %vm365, %v959, %v960
        %v963 = vadd.f32 %v953, %v961
        %965 = vrot.lane.b32.xlu0 %v963, 127
        %v966 = vpop.permute.xlu0 %965
        %v967 = vrot.slane %v966, 1
        %v968 = vsel %vm443, %v966, %v967
        %v970 = vsel %vm374, %v968, 0.0
        %v971 = vadd.f32 %v899, %v970
        %s972 = sld [smem:[#allocation6 + $0x33]]
        %v973 = vstv %s972
        %v974 = vmul.f32 %v973, %v838
        %v975 = vadd.f32 %v974, 0.0
        %s976 = sld [smem:[#allocation6 + $0x3a]]
        %v977 = vstv %s976
        %v978 = vmul.f32 %v977, %v838
        %980 = vrot.lane.b32.xlu0 %v978, 112
        %v981 = vpop.permute.xlu0 %980
        %v982 = vrot.slane %v981, 1
        %v983 = vsel %vm310, %v981, %v982
        %v985 = vadd.f32 %v975, %v983
        %s986 = sld [smem:[#allocation6 + $0x41]]
        %v987 = vstv %s986
        %v988 = vmul.f32 %v987, %v838
        %990 = vrot.lane.b32.xlu0 %v988, 96
        %v991 = vpop.permute.xlu0 %990
        %v992 = vrot.slane %v991, 1
        %v993 = vsel %vm321, %v991, %v992
        %v995 = vadd.f32 %v985, %v993
        %s996 = sld [smem:[#allocation6 + $0x48]]
        %v997 = vstv %s996
        %v998 = vmul.f32 %v997, %v838
        %1000 = vrot.lane.b32.xlu0 %v998, 80
        %v1001 = vpop.permute.xlu0 %1000
        %v1002 = vrot.slane %v1001, 1
        %v1003 = vsel %vm332, %v1001, %v1002
        %v1005 = vadd.f32 %v995, %v1003
        %s1006 = sld [smem:[#allocation6 + $0x4f]]
        %v1007 = vstv %s1006
        %v1008 = vmul.f32 %v1007, %v838
        %1010 = vrot.lane.b32.xlu0 %v1008, 64
        %v1011 = vpop.permute.xlu0 %1010
        %v1012 = vrot.slane %v1011, 1
        %v1013 = vsel %vm343, %v1011, %v1012
        %v1015 = vadd.f32 %v1005, %v1013
        %s1016 = sld [smem:[#allocation6 + $0x56]]
        %v1017 = vstv %s1016
        %v1018 = vmul.f32 %v1017, %v838
        %1020 = vrot.lane.b32.xlu0 %v1018, 48
        %v1021 = vpop.permute.xlu0 %1020
        %v1022 = vrot.slane %v1021, 1
        %v1023 = vsel %vm354, %v1021, %v1022
        %v1025 = vadd.f32 %v1015, %v1023
        %s1026 = sld [smem:[#allocation6 + $0x5d]]
        %v1027 = vstv %s1026
        %v1028 = vmul.f32 %v1027, %v838
        %1030 = vrot.lane.b32.xlu0 %v1028, 32
        %v1031 = vpop.permute.xlu0 %1030
        %v1032 = vrot.slane %v1031, 1
        %v1033 = vsel %vm365, %v1031, %v1032
        %v1035 = vadd.f32 %v1025, %v1033
        %1037 = vrot.lane.b32.xlu0 %v1035, 126
        %v1038 = vpop.permute.xlu0 %1037
        %v1039 = vrot.slane %v1038, 1
        %v1040 = vsel %vm520, %v1038, %v1039
        %v1042 = vsel %vm451, %v1040, 0.0
        %v1043 = vadd.f32 %v971, %v1042
        %s1044 = sld [smem:[#allocation6 + $0x34]]
        %v1045 = vstv %s1044
        %v1046 = vmul.f32 %v1045, %v838
        %v1047 = vadd.f32 %v1046, 0.0
        %s1048 = sld [smem:[#allocation6 + $0x3b]]
        %v1049 = vstv %s1048
        %v1050 = vmul.f32 %v1049, %v838
        %1052 = vrot.lane.b32.xlu0 %v1050, 112
        %v1053 = vpop.permute.xlu0 %1052
        %v1054 = vrot.slane %v1053, 1
        %v1055 = vsel %vm310, %v1053, %v1054
        %v1057 = vadd.f32 %v1047, %v1055
        %s1058 = sld [smem:[#allocation6 + $0x42]]
        %v1059 = vstv %s1058
        %v1060 = vmul.f32 %v1059, %v838
        %1062 = vrot.lane.b32.xlu0 %v1060, 96
        %v1063 = vpop.permute.xlu0 %1062
        %v1064 = vrot.slane %v1063, 1
        %v1065 = vsel %vm321, %v1063, %v1064
        %v1067 = vadd.f32 %v1057, %v1065
        %s1068 = sld [smem:[#allocation6 + $0x49]]
        %v1069 = vstv %s1068
        %v1070 = vmul.f32 %v1069, %v838
        %1072 = vrot.lane.b32.xlu0 %v1070, 80
        %v1073 = vpop.permute.xlu0 %1072
        %v1074 = vrot.slane %v1073, 1
        %v1075 = vsel %vm332, %v1073, %v1074
        %v1077 = vadd.f32 %v1067, %v1075
        %s1078 = sld [smem:[#allocation6 + $0x50]]
        %v1079 = vstv %s1078
        %v1080 = vmul.f32 %v1079, %v838
        %1082 = vrot.lane.b32.xlu0 %v1080, 64
        %v1083 = vpop.permute.xlu0 %1082
        %v1084 = vrot.slane %v1083, 1
        %v1085 = vsel %vm343, %v1083, %v1084
        %v1087 = vadd.f32 %v1077, %v1085
        %s1088 = sld [smem:[#allocation6 + $0x57]]
        %v1089 = vstv %s1088
        %v1090 = vmul.f32 %v1089, %v838
        %1092 = vrot.lane.b32.xlu0 %v1090, 48
        %v1093 = vpop.permute.xlu0 %1092
        %v1094 = vrot.slane %v1093, 1
        %v1095 = vsel %vm354, %v1093, %v1094
        %v1097 = vadd.f32 %v1087, %v1095
        %s1098 = sld [smem:[#allocation6 + $0x5e]]
        %v1099 = vstv %s1098
        %v1100 = vmul.f32 %v1099, %v838
        %1102 = vrot.lane.b32.xlu0 %v1100, 32
        %v1103 = vpop.permute.xlu0 %1102
        %v1104 = vrot.slane %v1103, 1
        %v1105 = vsel %vm365, %v1103, %v1104
        %v1107 = vadd.f32 %v1097, %v1105
        %1109 = vrot.lane.b32.xlu0 %v1107, 125
        %v1110 = vpop.permute.xlu0 %1109
        %v1111 = vrot.slane %v1110, 1
        %v1112 = vsel %vm596, %v1110, %v1111
        %v1114 = vsel %vm527, %v1112, 0.0
        %v1115 = vadd.f32 %v1043, %v1114
        %s1116 = sld [smem:[#allocation6 + $0x35]]
        %v1117 = vstv %s1116
        %v1118 = vmul.f32 %v1117, %v838
        %v1119 = vadd.f32 %v1118, 0.0
        %s1120 = sld [smem:[#allocation6 + $0x3c]]
        %v1121 = vstv %s1120
        %v1122 = vmul.f32 %v1121, %v838
        %1124 = vrot.lane.b32.xlu0 %v1122, 112
        %v1125 = vpop.permute.xlu0 %1124
        %v1126 = vrot.slane %v1125, 1
        %v1127 = vsel %vm310, %v1125, %v1126
        %v1129 = vadd.f32 %v1119, %v1127
        %s1130 = sld [smem:[#allocation6 + $0x43]]
        %v1131 = vstv %s1130
        %v1132 = vmul.f32 %v1131, %v838
        %1134 = vrot.lane.b32.xlu0 %v1132, 96
        %v1135 = vpop.permute.xlu0 %1134
        %v1136 = vrot.slane %v1135, 1
        %v1137 = vsel %vm321, %v1135, %v1136
        %v1139 = vadd.f32 %v1129, %v1137
        %s1140 = sld [smem:[#allocation6 + $0x4a]]
        %v1141 = vstv %s1140
        %v1142 = vmul.f32 %v1141, %v838
        %1144 = vrot.lane.b32.xlu0 %v1142, 80
        %v1145 = vpop.permute.xlu0 %1144
        %v1146 = vrot.slane %v1145, 1
        %v1147 = vsel %vm332, %v1145, %v1146
        %v1149 = vadd.f32 %v1139, %v1147
        %s1150 = sld [smem:[#allocation6 + $0x51]]
        %v1151 = vstv %s1150
        %v1152 = vmul.f32 %v1151, %v838
        %1154 = vrot.lane.b32.xlu0 %v1152, 64
        %v1155 = vpop.permute.xlu0 %1154
        %v1156 = vrot.slane %v1155, 1
        %v1157 = vsel %vm343, %v1155, %v1156
        %v1159 = vadd.f32 %v1149, %v1157
        %s1160 = sld [smem:[#allocation6 + $0x58]]
        %v1161 = vstv %s1160
        %v1162 = vmul.f32 %v1161, %v838
        %1164 = vrot.lane.b32.xlu0 %v1162, 48
        %v1165 = vpop.permute.xlu0 %1164
        %v1166 = vrot.slane %v1165, 1
        %v1167 = vsel %vm354, %v1165, %v1166
        %v1169 = vadd.f32 %v1159, %v1167
        %s1170 = sld [smem:[#allocation6 + $0x5f]]
        %v1171 = vstv %s1170
        %v1172 = vmul.f32 %v1171, %v838
        %1174 = vrot.lane.b32.xlu0 %v1172, 32
        %v1175 = vpop.permute.xlu0 %1174
        %v1176 = vrot.slane %v1175, 1
        %v1177 = vsel %vm365, %v1175, %v1176
        %v1179 = vadd.f32 %v1169, %v1177
        %1181 = vrot.lane.b32.xlu0 %v1179, 124
        %v1182 = vpop.permute.xlu0 %1181
        %v1183 = vrot.slane %v1182, 1
        %v1184 = vsel %vm673, %v1182, %v1183
        %v1186 = vsel %vm604, %v1184, 0.0
        %v1187 = vadd.f32 %v1115, %v1186
        %s1188 = sld [smem:[#allocation6 + $0x36]]
        %v1189 = vstv %s1188
        %v1190 = vmul.f32 %v1189, %v838
        %v1191 = vadd.f32 %v1190, 0.0
        %s1192 = sld [smem:[#allocation6 + $0x3d]]
        %v1193 = vstv %s1192
        %v1194 = vmul.f32 %v1193, %v838
        %1196 = vrot.lane.b32.xlu0 %v1194, 112
        %v1197 = vpop.permute.xlu0 %1196
        %v1198 = vrot.slane %v1197, 1
        %v1199 = vsel %vm310, %v1197, %v1198
        %v1201 = vadd.f32 %v1191, %v1199
        %s1202 = sld [smem:[#allocation6 + $0x44]]
        %v1203 = vstv %s1202
        %v1204 = vmul.f32 %v1203, %v838
        %1206 = vrot.lane.b32.xlu0 %v1204, 96
        %v1207 = vpop.permute.xlu0 %1206
        %v1208 = vrot.slane %v1207, 1
        %v1209 = vsel %vm321, %v1207, %v1208
        %v1211 = vadd.f32 %v1201, %v1209
        %s1212 = sld [smem:[#allocation6 + $0x4b]]
        %v1213 = vstv %s1212
        %v1214 = vmul.f32 %v1213, %v838
        %1216 = vrot.lane.b32.xlu0 %v1214, 80
        %v1217 = vpop.permute.xlu0 %1216
        %v1218 = vrot.slane %v1217, 1
        %v1219 = vsel %vm332, %v1217, %v1218
        %v1221 = vadd.f32 %v1211, %v1219
        %s1222 = sld [smem:[#allocation6 + $0x52]]
        %v1223 = vstv %s1222
        %v1224 = vmul.f32 %v1223, %v838
        %1226 = vrot.lane.b32.xlu0 %v1224, 64
        %v1227 = vpop.permute.xlu0 %1226
        %v1228 = vrot.slane %v1227, 1
        %v1229 = vsel %vm343, %v1227, %v1228
        %v1231 = vadd.f32 %v1221, %v1229
        %s1232 = sld [smem:[#allocation6 + $0x59]]
        %v1233 = vstv %s1232
        %v1234 = vmul.f32 %v1233, %v838
        %1236 = vrot.lane.b32.xlu0 %v1234, 48
        %v1237 = vpop.permute.xlu0 %1236
        %v1238 = vrot.slane %v1237, 1
        %v1239 = vsel %vm354, %v1237, %v1238
        %v1241 = vadd.f32 %v1231, %v1239
        %s1242 = sld [smem:[#allocation6 + $0x60]]
        %v1243 = vstv %s1242
        %v1244 = vmul.f32 %v1243, %v838
        %1246 = vrot.lane.b32.xlu0 %v1244, 32
        %v1247 = vpop.permute.xlu0 %1246
        %v1248 = vrot.slane %v1247, 1
        %v1249 = vsel %vm365, %v1247, %v1248
        %v1251 = vadd.f32 %v1241, %v1249
        %1253 = vrot.lane.b32.xlu0 %v1251, 123
        %v1254 = vpop.permute.xlu0 %1253
        %v1255 = vrot.slane %v1254, 1
        %v1256 = vsel %vm750, %v1254, %v1255
        %v1258 = vsel %vm681, %v1256, 0.0
        %v1259 = vadd.f32 %v1187, %v1258
        %s1260 = sld [smem:[#allocation6 + $0x37]]
        %v1261 = vstv %s1260
        %v1262 = vmul.f32 %v1261, %v838
        %v1263 = vadd.f32 %v1262, 0.0
        %s1264 = sld [smem:[#allocation6 + $0x3e]]
        %v1265 = vstv %s1264
        %v1266 = vmul.f32 %v1265, %v838
        %1268 = vrot.lane.b32.xlu0 %v1266, 112
        %v1269 = vpop.permute.xlu0 %1268
        %v1270 = vrot.slane %v1269, 1
        %v1271 = vsel %vm310, %v1269, %v1270
        %v1273 = vadd.f32 %v1263, %v1271
        %s1274 = sld [smem:[#allocation6 + $0x45]]
        %v1275 = vstv %s1274
        %v1276 = vmul.f32 %v1275, %v838
        %1278 = vrot.lane.b32.xlu0 %v1276, 96
        %v1279 = vpop.permute.xlu0 %1278
        %v1280 = vrot.slane %v1279, 1
        %v1281 = vsel %vm321, %v1279, %v1280
        %v1283 = vadd.f32 %v1273, %v1281
        %s1284 = sld [smem:[#allocation6 + $0x4c]]
        %v1285 = vstv %s1284
        %v1286 = vmul.f32 %v1285, %v838
        %1288 = vrot.lane.b32.xlu0 %v1286, 80
        %v1289 = vpop.permute.xlu0 %1288
        %v1290 = vrot.slane %v1289, 1
        %v1291 = vsel %vm332, %v1289, %v1290
        %v1293 = vadd.f32 %v1283, %v1291
        %s1294 = sld [smem:[#allocation6 + $0x53]]
        %v1295 = vstv %s1294
        %v1296 = vmul.f32 %v1295, %v838
        %1298 = vrot.lane.b32.xlu0 %v1296, 64
        %v1299 = vpop.permute.xlu0 %1298
        %v1300 = vrot.slane %v1299, 1
        %v1301 = vsel %vm343, %v1299, %v1300
        %v1303 = vadd.f32 %v1293, %v1301
        %s1304 = sld [smem:[#allocation6 + $0x5a]]
        %v1305 = vstv %s1304
        %v1306 = vmul.f32 %v1305, %v838
        %1308 = vrot.lane.b32.xlu0 %v1306, 48
        %v1309 = vpop.permute.xlu0 %1308
        %v1310 = vrot.slane %v1309, 1
        %v1311 = vsel %vm354, %v1309, %v1310
        %v1313 = vadd.f32 %v1303, %v1311
        %s1314 = sld [smem:[#allocation6 + $0x61]]
        %v1315 = vstv %s1314
        %v1316 = vmul.f32 %v1315, %v838
        %1318 = vrot.lane.b32.xlu0 %v1316, 32
        %v1319 = vpop.permute.xlu0 %1318
        %v1320 = vrot.slane %v1319, 1
        %v1321 = vsel %vm365, %v1319, %v1320
        %v1323 = vadd.f32 %v1313, %v1321
        %1325 = vrot.lane.b32.xlu0 %v1323, 122
        %v1326 = vpop.permute.xlu0 %1325
        %v1327 = vrot.slane %v1326, 1
        %v1328 = vsel %vm827, %v1326, %v1327
        %v1330 = vsel %vm758, %v1328, 0.0
        %v1331 = vadd.f32 %v1259, %v1330
        %v1332 = vxor.u32 %v1331, 2147483648
        %v1333 = vmul.f32 %v1332, 1.442695
        %v1334 = vpow.pop %v1333
        %v1335 = vadd.f32 %v1334, 1.0
        %v1336 = vrcp.pop %v1335
        %v1337 = vmul.f32 1.0, %v1336
        %1338 = vst.msk [vmem:[%s174] sm:$0x3] %vm231, %v1337
      $region36: #{spatial_attention.1} parent=27 // pred_fallthru
        _
      %p1339 = scmp.lt.s32.totalorder %s24, 1
      %s1340 = scalar_select %p1339, %s24, 1
      %s1341 = smul.addr %s1340, 2
      %s1342 = scalar_lea.vmem %s3, %s1341
      // Predicated region
      $region37: #{spatial_attention.1} parent=27 // pred_check
        %p1343 = pneg %p99
      $region38: #{spatial_attention.1} parent=27 // pred_check_branch
        %1345 = sbr.rel (%p1343) target = $region40
      $region39: #{spatial_attention.1} parent=27 // pred_region
        _
      $region40: #{spatial_attention.1} parent=27 // pred_fallthru
        _
    $region28: #{spatial_attention.1} parent=5 // pred_fallthru
      _
    %p1346 = scmp.le.s32.totalorder 2, %s15
    // Predicated region
    $region41: #{spatial_attention.1} parent=5 // pred_check
      %p1347 = pneg %p1346
    $region42: #{spatial_attention.1} parent=5 // pred_check_branch
      %1349 = sbr.rel (%p1347) target = $region44
    $region43: #{spatial_attention.1} parent=5 // pred_region
      %s1350 = ssub.s32 %s15, 2
      // Predicated region
      $region45: #{spatial_attention.1} parent=43 // pred_check
        %p1351 = pneg %p105
      $region46: #{spatial_attention.1} parent=43 // pred_check_branch
        %1353 = sbr.rel (%p1351) target = $region48
      $region47: #{spatial_attention.1} parent=43 // pred_region
        %p1354 = scmp.lt.s32.totalorder %s26, 1
        %s1355 = scalar_select %p1354, %s26, 1
        %s1356 = smul.addr %s1355, 2
        %s1357 = scalar_lea.vmem %s3, %s1356
      $region48: #{spatial_attention.1} parent=43 // pred_fallthru
        _
    $region44: #{spatial_attention.1} parent=5 // pred_fallthru
      _
  $region6: #{spatial_attention.1} parent=0 // loop_footer
    %s19 = sadd.s32 1, %s15
  $region7: #{spatial_attention.1} parent=0 // loop_footer_branch
    %14 = sbr.rel target = $region3
  $region8: #{spatial_attention.1} parent=0 // loop_exit
    _

</llo_original>
